<compile_context>
chip_gen: v7x
topology: tpu7x:2x2x1
jax: 0.10.0
libtpu: 0.0.40
codegen_flags: <defaults>
</compile_context>

<pallas_src>
import functools

import jax
import jax.numpy as jnp
import numpy as np
from jax.experimental import pallas as pl
from jax.experimental.pallas import tpu as pltpu


def _basic_block_kernel(x_ref, masks_ref, w1_ref, w2_ref,
                        s1_ref, b1_ref, s2_ref, b2_ref, out_ref, *, W):
    """One batch tile: x_ref/out_ref are (C, S), S = b_tile*H*W on the lane axis."""
    S = x_ref.shape[1]
    PAD = W + 1                       # covers flattened shifts in [-(W+1), W+1]
    masks = masks_ref[...]            # (9, S) f32 per-tap edge-validity masks

    def conv3x3(a, w_ref):
        # a: (cin, S); w_ref: (9, cout, cin)  -> (cout, S) f32
        cin = a.shape[0]
        cout = w_ref.shape[1]
        zpad = jnp.zeros((cin, PAD), a.dtype)
        ap = jnp.concatenate([zpad, a, zpad], axis=1)    # zero halo on lane axis
        acc = jnp.zeros((cout, S), jnp.float32)
        for dy in range(3):
            for dx in range(3):
                t = dy * 3 + dx
                d = (dy - 1) * W + (dx - 1)
                sh = ap[:, PAD + d:PAD + d + S]          # static lane shift
                if (dy, dx) != (1, 1):                   # center tap needs no mask
                    sh = sh * masks[t:t + 1, :]
                acc = acc + jnp.dot(w_ref[t], sh,
                                    preferred_element_type=jnp.float32)
        return acc

    x = x_ref[...]                                       # (Cin, S); also the residual

    # conv1 + folded BN1 + ReLU (intermediate stays in vregs)
    h = conv3x3(x, w1_ref)
    h = jnp.maximum(h * s1_ref[...] + b1_ref[...], 0.0)

    # conv2 + folded BN2 + residual add + ReLU
    o = conv3x3(h, w2_ref)
    o = o * s2_ref[...] + b2_ref[...] + x
    out_ref[...] = jnp.maximum(o, 0.0)


def basic_block_forward(x_nchw, w1, w2, scale1, bias1, scale2, bias2, *,
                        b_tile=1):
    """x_nchw: (N, C, H, W) f32; w1/w2 HWIO (3,3,Cin,Cout). Returns (N, C, H, W)."""
    N, C, H, W = x_nchw.shape
    Cout = w1.shape[3]
    assert C == Cout, "no downsample => inplanes must equal planes"
    assert N % b_tile == 0
    S = b_tile * H * W
    n_steps = N // b_tile
    assert n_steps == 1 or S % 128 == 0, "batch-tile lane width must be 128-aligned"

    # Lane-dense layout: channels on sublanes, flattened (b, y, x) on lanes.
    x_cs = jnp.transpose(x_nchw, (1, 0, 2, 3)).reshape(C, N * H * W)

    # Per-tap weights (9, Cout, Cin), tap index t = dy*3 + dx.
    w1_t = jnp.transpose(w1, (0, 1, 3, 2)).reshape(9, Cout, C)
    w2_t = jnp.transpose(w2, (0, 1, 3, 2)).reshape(9, Cout, Cout)

    s1 = scale1.reshape(Cout, 1)
    b1 = bias1.reshape(Cout, 1)
    s2 = scale2.reshape(Cout, 1)
    b2 = bias2.reshape(Cout, 1)

    # Per-tap edge-validity masks over the block's flattened spatial lane axis
    # (also kills cross-batch bleed when b_tile > 1).  Computed once, host-side.
    yy, xx = np.meshgrid(np.arange(H), np.arange(W), indexing="ij")
    yy = np.tile(yy.reshape(-1), b_tile)
    xx = np.tile(xx.reshape(-1), b_tile)
    masks = np.zeros((9, S), np.float32)
    for dy in range(3):
        for dx in range(3):
            oy, ox = dy - 1, dx - 1
            valid = ((yy + oy >= 0) & (yy + oy < H) &
                     (xx + ox >= 0) & (xx + ox < W))
            masks[dy * 3 + dx] = valid.astype(np.float32)
    masks = jnp.asarray(masks)

    kernel = functools.partial(_basic_block_kernel, W=W)

    y_cs = pl.pallas_call(
        kernel,
        out_shape=jax.ShapeDtypeStruct((Cout, N * H * W), jnp.float32),
        grid_spec=pltpu.PrefetchScalarGridSpec(
            num_scalar_prefetch=0,
            grid=(n_steps,),
            in_specs=[
                pl.BlockSpec((C, S), lambda i: (0, i)),              # x (and residual)
                pl.BlockSpec((9, S), lambda i: (0, 0)),              # edge masks
                pl.BlockSpec((9, Cout, C), lambda i: (0, 0, 0)),     # conv1 taps
                pl.BlockSpec((9, Cout, Cout), lambda i: (0, 0, 0)),  # conv2 taps
                pl.BlockSpec((Cout, 1), lambda i: (0, 0)),           # bn1 scale
                pl.BlockSpec((Cout, 1), lambda i: (0, 0)),           # bn1 bias
                pl.BlockSpec((Cout, 1), lambda i: (0, 0)),           # bn2 scale
                pl.BlockSpec((Cout, 1), lambda i: (0, 0)),           # bn2 bias
            ],
            out_specs=pl.BlockSpec((Cout, S), lambda i: (0, i)),
        ),
        compiler_params=pltpu.CompilerParams(
            dimension_semantics=("parallel",)),
    )(x_cs, masks, w1_t, w2_t, s1, b1, s2, b2)

    return jnp.transpose(y_cs.reshape(Cout, N, H, W), (1, 0, 2, 3))


def ref_forward(x_nchw, w1, w2, scale1, bias1, scale2, bias2):
    """Pure-JAX reference (same folded-BN inference semantics)."""
    x = jnp.transpose(x_nchw, (0, 2, 3, 1))
    dn = jax.lax.conv_dimension_numbers(x.shape, w1.shape,
                                        ('NHWC', 'HWIO', 'NHWC'))
    o = jax.lax.conv_general_dilated(x, w1, (1, 1), ((1, 1), (1, 1)),
                                     dimension_numbers=dn)
    o = jnp.maximum(o * scale1 + bias1, 0.0)
    o = jax.lax.conv_general_dilated(o, w2, (1, 1), ((1, 1), (1, 1)),
                                     dimension_numbers=dn)
    o = o * scale2 + bias2 + x
    o = jnp.maximum(o, 0.0)
    return jnp.transpose(o, (0, 3, 1, 2))


if __name__ == "__main__":
    # BasicBlock(inplanes=4, planes=4, stride=1, downsample=None)
    N, C, H, W = 2, 4, 16, 16
    planes = C
    eps = 1e-5

    key = jax.random.PRNGKey(0)
    kx, kw1, kw2, kg1, kb1, km1, kv1, kg2, kb2, km2, kv2 = jax.random.split(key, 11)

    x = jax.random.normal(kx, (N, C, H, W), jnp.float32)

    # conv weights in HWIO layout (3, 3, in, out), bias=False per conv3x3
    w1 = 0.1 * jax.random.normal(kw1, (3, 3, C, planes), jnp.float32)
    w2 = 0.1 * jax.random.normal(kw2, (3, 3, planes, planes), jnp.float32)

    # BatchNorm params + running stats (inference semantics), deterministic
    gamma1 = 1.0 + 0.1 * jax.random.normal(kg1, (planes,), jnp.float32)
    beta1 = 0.1 * jax.random.normal(kb1, (planes,), jnp.float32)
    rmean1 = 0.1 * jax.random.normal(km1, (planes,), jnp.float32)
    rvar1 = jax.random.uniform(kv1, (planes,), jnp.float32, 0.5, 1.5)
    gamma2 = 1.0 + 0.1 * jax.random.normal(kg2, (planes,), jnp.float32)
    beta2 = 0.1 * jax.random.normal(kb2, (planes,), jnp.float32)
    rmean2 = 0.1 * jax.random.normal(km2, (planes,), jnp.float32)
    rvar2 = jax.random.uniform(kv2, (planes,), jnp.float32, 0.5, 1.5)

    # fold BN into per-channel scale/bias: y = x*scale + bias
    scale1 = gamma1 / jnp.sqrt(rvar1 + eps)
    bias1 = beta1 - rmean1 * scale1
    scale2 = gamma2 / jnp.sqrt(rvar2 + eps)
    bias2 = beta2 - rmean2 * scale2

    y = basic_block_forward(x, w1, w2, scale1, bias1, scale2, bias2)
    y = jax.block_until_ready(y)

    y_ref = ref_forward(x, w1, w2, scale1, bias1, scale2, bias2)
    np.testing.assert_allclose(np.asarray(y), np.asarray(y_ref),
                               rtol=1e-4, atol=1e-4)
    print("KERNEL_OK")
</pallas_src>

<mosaic_0001>
module attributes {stable_mosaic.version = 11 : i64} {
  func.func @_basic_block_kernel(%arg0: i32, %arg1: memref<4x256xf32, #tpu.memory_space<vmem>>, %arg2: memref<9x256xf32, #tpu.memory_space<vmem>>, %arg3: memref<9x4x4xf32, #tpu.memory_space<vmem>>, %arg4: memref<9x4x4xf32, #tpu.memory_space<vmem>>, %arg5: memref<4x1xf32, #tpu.memory_space<vmem>>, %arg6: memref<4x1xf32, #tpu.memory_space<vmem>>, %arg7: memref<4x1xf32, #tpu.memory_space<vmem>>, %arg8: memref<4x1xf32, #tpu.memory_space<vmem>>, %arg9: memref<4x256xf32, #tpu.memory_space<vmem>>) attributes {dimension_semantics = [#tpu.dimension_semantics<parallel>], iteration_bounds = array<i64: 2>, scalar_prefetch = 0 : i64, scratch_operands = 0 : i64, tpu.core_type = #tpu.core_type<tc>, window_params = [{transform_indices = @transform_0, window_bounds = array<i64: 4, 256>}, {pipeline_mode = #tpu.pipeline_mode<synchronous>, transform_indices = @transform_1, window_bounds = array<i64: 9, 256>}, {pipeline_mode = #tpu.pipeline_mode<synchronous>, transform_indices = @transform_2, window_bounds = array<i64: 9, 4, 4>}, {pipeline_mode = #tpu.pipeline_mode<synchronous>, transform_indices = @transform_3, window_bounds = array<i64: 9, 4, 4>}, {pipeline_mode = #tpu.pipeline_mode<synchronous>, transform_indices = @transform_4, window_bounds = array<i64: 4, 1>}, {pipeline_mode = #tpu.pipeline_mode<synchronous>, transform_indices = @transform_5, window_bounds = array<i64: 4, 1>}, {pipeline_mode = #tpu.pipeline_mode<synchronous>, transform_indices = @transform_6, window_bounds = array<i64: 4, 1>}, {pipeline_mode = #tpu.pipeline_mode<synchronous>, transform_indices = @transform_7, window_bounds = array<i64: 4, 1>}, {transform_indices = @transform_8, window_bounds = array<i64: 4, 256>}]} {
    %c0 = arith.constant 0 : index
    %c0_0 = arith.constant 0 : index
    %0 = vector.load %arg2[%c0, %c0_0] : memref<9x256xf32, #tpu.memory_space<vmem>>, vector<9x256xf32>
    %c0_1 = arith.constant 0 : index
    %c0_2 = arith.constant 0 : index
    %1 = vector.load %arg1[%c0_1, %c0_2] : memref<4x256xf32, #tpu.memory_space<vmem>>, vector<4x256xf32>
    %cst = arith.constant 0.000000e+00 : f32
    %2 = vector.broadcast %cst : f32 to vector<4x17xf32>
    %3 = tpu.concatenate %2, %1, %2 in 1 : vector<4x17xf32>, vector<4x256xf32>, vector<4x17xf32> -> vector<4x290xf32>
    %cst_3 = arith.constant 0.000000e+00 : f32
    %4 = vector.broadcast %cst_3 : f32 to vector<4x256xf32>
    %5 = vector.extract_strided_slice %3 {offsets = [0, 0], sizes = [4, 256], strides = [1, 1]} : vector<4x290xf32> to vector<4x256xf32>
    %6 = vector.extract_strided_slice %0 {offsets = [0, 0], sizes = [1, 256], strides = [1, 1]} : vector<9x256xf32> to vector<1x256xf32>
    %7 = vector.broadcast %6 : vector<1x256xf32> to vector<4x256xf32>
    %8 = arith.mulf %5, %7 : vector<4x256xf32>
    %c0_4 = arith.constant 0 : index
    %c0_5 = arith.constant 0 : index
    %c0_6 = arith.constant 0 : index
    %9 = vector.load %arg3[%c0_4, %c0_5, %c0_6] : memref<9x4x4xf32, #tpu.memory_space<vmem>>, vector<1x4x4xf32>
    %10 = vector.shape_cast %9 : vector<1x4x4xf32> to vector<4x4xf32>
    %cst_7 = arith.constant dense<0.000000e+00> : vector<4x256xf32>
    %11 = tpu.matmul %10, %8, %cst_7 {dimension_numbers = #tpu.dot_dimension_numbers<[1], [0], [0], [1], [0, 0, 1, 1], [], []>} : vector<4x4xf32>, vector<4x256xf32>, vector<4x256xf32> -> vector<4x256xf32>
    %12 = arith.addf %4, %11 : vector<4x256xf32>
    %13 = vector.extract_strided_slice %3 {offsets = [0, 1], sizes = [4, 256], strides = [1, 1]} : vector<4x290xf32> to vector<4x256xf32>
    %14 = vector.extract_strided_slice %0 {offsets = [1, 0], sizes = [1, 256], strides = [1, 1]} : vector<9x256xf32> to vector<1x256xf32>
    %15 = vector.broadcast %14 : vector<1x256xf32> to vector<4x256xf32>
    %16 = arith.mulf %13, %15 : vector<4x256xf32>
    %c1 = arith.constant 1 : index
    %c0_8 = arith.constant 0 : index
    %c0_9 = arith.constant 0 : index
    %17 = vector.load %arg3[%c1, %c0_8, %c0_9] : memref<9x4x4xf32, #tpu.memory_space<vmem>>, vector<1x4x4xf32>
    %18 = vector.shape_cast %17 : vector<1x4x4xf32> to vector<4x4xf32>
    %cst_10 = arith.constant dense<0.000000e+00> : vector<4x256xf32>
    %19 = tpu.matmul %18, %16, %cst_10 {dimension_numbers = #tpu.dot_dimension_numbers<[1], [0], [0], [1], [0, 0, 1, 1], [], []>} : vector<4x4xf32>, vector<4x256xf32>, vector<4x256xf32> -> vector<4x256xf32>
    %20 = arith.addf %12, %19 : vector<4x256xf32>
    %21 = vector.extract_strided_slice %3 {offsets = [0, 2], sizes = [4, 256], strides = [1, 1]} : vector<4x290xf32> to vector<4x256xf32>
    %22 = vector.extract_strided_slice %0 {offsets = [2, 0], sizes = [1, 256], strides = [1, 1]} : vector<9x256xf32> to vector<1x256xf32>
    %23 = vector.broadcast %22 : vector<1x256xf32> to vector<4x256xf32>
    %24 = arith.mulf %21, %23 : vector<4x256xf32>
    %c2 = arith.constant 2 : index
    %c0_11 = arith.constant 0 : index
    %c0_12 = arith.constant 0 : index
    %25 = vector.load %arg3[%c2, %c0_11, %c0_12] : memref<9x4x4xf32, #tpu.memory_space<vmem>>, vector<1x4x4xf32>
    %26 = vector.shape_cast %25 : vector<1x4x4xf32> to vector<4x4xf32>
    %cst_13 = arith.constant dense<0.000000e+00> : vector<4x256xf32>
    %27 = tpu.matmul %26, %24, %cst_13 {dimension_numbers = #tpu.dot_dimension_numbers<[1], [0], [0], [1], [0, 0, 1, 1], [], []>} : vector<4x4xf32>, vector<4x256xf32>, vector<4x256xf32> -> vector<4x256xf32>
    %28 = arith.addf %20, %27 : vector<4x256xf32>
    %29 = vector.extract_strided_slice %3 {offsets = [0, 16], sizes = [4, 256], strides = [1, 1]} : vector<4x290xf32> to vector<4x256xf32>
    %30 = vector.extract_strided_slice %0 {offsets = [3, 0], sizes = [1, 256], strides = [1, 1]} : vector<9x256xf32> to vector<1x256xf32>
    %31 = vector.broadcast %30 : vector<1x256xf32> to vector<4x256xf32>
    %32 = arith.mulf %29, %31 : vector<4x256xf32>
    %c3 = arith.constant 3 : index
    %c0_14 = arith.constant 0 : index
    %c0_15 = arith.constant 0 : index
    %33 = vector.load %arg3[%c3, %c0_14, %c0_15] : memref<9x4x4xf32, #tpu.memory_space<vmem>>, vector<1x4x4xf32>
    %34 = vector.shape_cast %33 : vector<1x4x4xf32> to vector<4x4xf32>
    %cst_16 = arith.constant dense<0.000000e+00> : vector<4x256xf32>
    %35 = tpu.matmul %34, %32, %cst_16 {dimension_numbers = #tpu.dot_dimension_numbers<[1], [0], [0], [1], [0, 0, 1, 1], [], []>} : vector<4x4xf32>, vector<4x256xf32>, vector<4x256xf32> -> vector<4x256xf32>
    %36 = arith.addf %28, %35 : vector<4x256xf32>
    %37 = vector.extract_strided_slice %3 {offsets = [0, 17], sizes = [4, 256], strides = [1, 1]} : vector<4x290xf32> to vector<4x256xf32>
    %c4 = arith.constant 4 : index
    %c0_17 = arith.constant 0 : index
    %c0_18 = arith.constant 0 : index
    %38 = vector.load %arg3[%c4, %c0_17, %c0_18] : memref<9x4x4xf32, #tpu.memory_space<vmem>>, vector<1x4x4xf32>
    %39 = vector.shape_cast %38 : vector<1x4x4xf32> to vector<4x4xf32>
    %cst_19 = arith.constant dense<0.000000e+00> : vector<4x256xf32>
    %40 = tpu.matmul %39, %37, %cst_19 {dimension_numbers = #tpu.dot_dimension_numbers<[1], [0], [0], [1], [0, 0, 1, 1], [], []>} : vector<4x4xf32>, vector<4x256xf32>, vector<4x256xf32> -> vector<4x256xf32>
    %41 = arith.addf %36, %40 : vector<4x256xf32>
    %42 = vector.extract_strided_slice %3 {offsets = [0, 18], sizes = [4, 256], strides = [1, 1]} : vector<4x290xf32> to vector<4x256xf32>
    %43 = vector.extract_strided_slice %0 {offsets = [5, 0], sizes = [1, 256], strides = [1, 1]} : vector<9x256xf32> to vector<1x256xf32>
    %44 = vector.broadcast %43 : vector<1x256xf32> to vector<4x256xf32>
    %45 = arith.mulf %42, %44 : vector<4x256xf32>
    %c5 = arith.constant 5 : index
    %c0_20 = arith.constant 0 : index
    %c0_21 = arith.constant 0 : index
    %46 = vector.load %arg3[%c5, %c0_20, %c0_21] : memref<9x4x4xf32, #tpu.memory_space<vmem>>, vector<1x4x4xf32>
    %47 = vector.shape_cast %46 : vector<1x4x4xf32> to vector<4x4xf32>
    %cst_22 = arith.constant dense<0.000000e+00> : vector<4x256xf32>
    %48 = tpu.matmul %47, %45, %cst_22 {dimension_numbers = #tpu.dot_dimension_numbers<[1], [0], [0], [1], [0, 0, 1, 1], [], []>} : vector<4x4xf32>, vector<4x256xf32>, vector<4x256xf32> -> vector<4x256xf32>
    %49 = arith.addf %41, %48 : vector<4x256xf32>
    %50 = vector.extract_strided_slice %3 {offsets = [0, 32], sizes = [4, 256], strides = [1, 1]} : vector<4x290xf32> to vector<4x256xf32>
    %51 = vector.extract_strided_slice %0 {offsets = [6, 0], sizes = [1, 256], strides = [1, 1]} : vector<9x256xf32> to vector<1x256xf32>
    %52 = vector.broadcast %51 : vector<1x256xf32> to vector<4x256xf32>
    %53 = arith.mulf %50, %52 : vector<4x256xf32>
    %c6 = arith.constant 6 : index
    %c0_23 = arith.constant 0 : index
    %c0_24 = arith.constant 0 : index
    %54 = vector.load %arg3[%c6, %c0_23, %c0_24] : memref<9x4x4xf32, #tpu.memory_space<vmem>>, vector<1x4x4xf32>
    %55 = vector.shape_cast %54 : vector<1x4x4xf32> to vector<4x4xf32>
    %cst_25 = arith.constant dense<0.000000e+00> : vector<4x256xf32>
    %56 = tpu.matmul %55, %53, %cst_25 {dimension_numbers = #tpu.dot_dimension_numbers<[1], [0], [0], [1], [0, 0, 1, 1], [], []>} : vector<4x4xf32>, vector<4x256xf32>, vector<4x256xf32> -> vector<4x256xf32>
    %57 = arith.addf %49, %56 : vector<4x256xf32>
    %58 = vector.extract_strided_slice %3 {offsets = [0, 33], sizes = [4, 256], strides = [1, 1]} : vector<4x290xf32> to vector<4x256xf32>
    %59 = vector.extract_strided_slice %0 {offsets = [7, 0], sizes = [1, 256], strides = [1, 1]} : vector<9x256xf32> to vector<1x256xf32>
    %60 = vector.broadcast %59 : vector<1x256xf32> to vector<4x256xf32>
    %61 = arith.mulf %58, %60 : vector<4x256xf32>
    %c7 = arith.constant 7 : index
    %c0_26 = arith.constant 0 : index
    %c0_27 = arith.constant 0 : index
    %62 = vector.load %arg3[%c7, %c0_26, %c0_27] : memref<9x4x4xf32, #tpu.memory_space<vmem>>, vector<1x4x4xf32>
    %63 = vector.shape_cast %62 : vector<1x4x4xf32> to vector<4x4xf32>
    %cst_28 = arith.constant dense<0.000000e+00> : vector<4x256xf32>
    %64 = tpu.matmul %63, %61, %cst_28 {dimension_numbers = #tpu.dot_dimension_numbers<[1], [0], [0], [1], [0, 0, 1, 1], [], []>} : vector<4x4xf32>, vector<4x256xf32>, vector<4x256xf32> -> vector<4x256xf32>
    %65 = arith.addf %57, %64 : vector<4x256xf32>
    %66 = vector.extract_strided_slice %3 {offsets = [0, 34], sizes = [4, 256], strides = [1, 1]} : vector<4x290xf32> to vector<4x256xf32>
    %67 = vector.extract_strided_slice %0 {offsets = [8, 0], sizes = [1, 256], strides = [1, 1]} : vector<9x256xf32> to vector<1x256xf32>
    %68 = vector.broadcast %67 : vector<1x256xf32> to vector<4x256xf32>
    %69 = arith.mulf %66, %68 : vector<4x256xf32>
    %c8 = arith.constant 8 : index
    %c0_29 = arith.constant 0 : index
    %c0_30 = arith.constant 0 : index
    %70 = vector.load %arg3[%c8, %c0_29, %c0_30] : memref<9x4x4xf32, #tpu.memory_space<vmem>>, vector<1x4x4xf32>
    %71 = vector.shape_cast %70 : vector<1x4x4xf32> to vector<4x4xf32>
    %cst_31 = arith.constant dense<0.000000e+00> : vector<4x256xf32>
    %72 = tpu.matmul %71, %69, %cst_31 {dimension_numbers = #tpu.dot_dimension_numbers<[1], [0], [0], [1], [0, 0, 1, 1], [], []>} : vector<4x4xf32>, vector<4x256xf32>, vector<4x256xf32> -> vector<4x256xf32>
    %73 = arith.addf %65, %72 : vector<4x256xf32>
    %c0_32 = arith.constant 0 : index
    %c0_33 = arith.constant 0 : index
    %74 = vector.load %arg5[%c0_32, %c0_33] : memref<4x1xf32, #tpu.memory_space<vmem>>, vector<4x1xf32>
    %75 = vector.broadcast %74 : vector<4x1xf32> to vector<4x256xf32>
    %76 = arith.mulf %73, %75 : vector<4x256xf32>
    %c0_34 = arith.constant 0 : index
    %c0_35 = arith.constant 0 : index
    %77 = vector.load %arg6[%c0_34, %c0_35] : memref<4x1xf32, #tpu.memory_space<vmem>>, vector<4x1xf32>
    %78 = vector.broadcast %77 : vector<4x1xf32> to vector<4x256xf32>
    %79 = arith.addf %76, %78 : vector<4x256xf32>
    %cst_36 = arith.constant 0.000000e+00 : f32
    %80 = vector.broadcast %cst_36 : f32 to vector<4x256xf32>
    %81 = arith.maximumf %79, %80 : vector<4x256xf32>
    %cst_37 = arith.constant 0.000000e+00 : f32
    %82 = vector.broadcast %cst_37 : f32 to vector<4x17xf32>
    %83 = tpu.concatenate %82, %81, %82 in 1 : vector<4x17xf32>, vector<4x256xf32>, vector<4x17xf32> -> vector<4x290xf32>
    %cst_38 = arith.constant 0.000000e+00 : f32
    %84 = vector.broadcast %cst_38 : f32 to vector<4x256xf32>
    %85 = vector.extract_strided_slice %83 {offsets = [0, 0], sizes = [4, 256], strides = [1, 1]} : vector<4x290xf32> to vector<4x256xf32>
    %86 = vector.extract_strided_slice %0 {offsets = [0, 0], sizes = [1, 256], strides = [1, 1]} : vector<9x256xf32> to vector<1x256xf32>
    %87 = vector.broadcast %86 : vector<1x256xf32> to vector<4x256xf32>
    %88 = arith.mulf %85, %87 : vector<4x256xf32>
    %c0_39 = arith.constant 0 : index
    %c0_40 = arith.constant 0 : index
    %c0_41 = arith.constant 0 : index
    %89 = vector.load %arg4[%c0_39, %c0_40, %c0_41] : memref<9x4x4xf32, #tpu.memory_space<vmem>>, vector<1x4x4xf32>
    %90 = vector.shape_cast %89 : vector<1x4x4xf32> to vector<4x4xf32>
    %cst_42 = arith.constant dense<0.000000e+00> : vector<4x256xf32>
    %91 = tpu.matmul %90, %88, %cst_42 {dimension_numbers = #tpu.dot_dimension_numbers<[1], [0], [0], [1], [0, 0, 1, 1], [], []>} : vector<4x4xf32>, vector<4x256xf32>, vector<4x256xf32> -> vector<4x256xf32>
    %92 = arith.addf %84, %91 : vector<4x256xf32>
    %93 = vector.extract_strided_slice %83 {offsets = [0, 1], sizes = [4, 256], strides = [1, 1]} : vector<4x290xf32> to vector<4x256xf32>
    %94 = vector.extract_strided_slice %0 {offsets = [1, 0], sizes = [1, 256], strides = [1, 1]} : vector<9x256xf32> to vector<1x256xf32>
    %95 = vector.broadcast %94 : vector<1x256xf32> to vector<4x256xf32>
    %96 = arith.mulf %93, %95 : vector<4x256xf32>
    %c1_43 = arith.constant 1 : index
    %c0_44 = arith.constant 0 : index
    %c0_45 = arith.constant 0 : index
    %97 = vector.load %arg4[%c1_43, %c0_44, %c0_45] : memref<9x4x4xf32, #tpu.memory_space<vmem>>, vector<1x4x4xf32>
    %98 = vector.shape_cast %97 : vector<1x4x4xf32> to vector<4x4xf32>
    %cst_46 = arith.constant dense<0.000000e+00> : vector<4x256xf32>
    %99 = tpu.matmul %98, %96, %cst_46 {dimension_numbers = #tpu.dot_dimension_numbers<[1], [0], [0], [1], [0, 0, 1, 1], [], []>} : vector<4x4xf32>, vector<4x256xf32>, vector<4x256xf32> -> vector<4x256xf32>
    %100 = arith.addf %92, %99 : vector<4x256xf32>
    %101 = vector.extract_strided_slice %83 {offsets = [0, 2], sizes = [4, 256], strides = [1, 1]} : vector<4x290xf32> to vector<4x256xf32>
    %102 = vector.extract_strided_slice %0 {offsets = [2, 0], sizes = [1, 256], strides = [1, 1]} : vector<9x256xf32> to vector<1x256xf32>
    %103 = vector.broadcast %102 : vector<1x256xf32> to vector<4x256xf32>
    %104 = arith.mulf %101, %103 : vector<4x256xf32>
    %c2_47 = arith.constant 2 : index
    %c0_48 = arith.constant 0 : index
    %c0_49 = arith.constant 0 : index
    %105 = vector.load %arg4[%c2_47, %c0_48, %c0_49] : memref<9x4x4xf32, #tpu.memory_space<vmem>>, vector<1x4x4xf32>
    %106 = vector.shape_cast %105 : vector<1x4x4xf32> to vector<4x4xf32>
    %cst_50 = arith.constant dense<0.000000e+00> : vector<4x256xf32>
    %107 = tpu.matmul %106, %104, %cst_50 {dimension_numbers = #tpu.dot_dimension_numbers<[1], [0], [0], [1], [0, 0, 1, 1], [], []>} : vector<4x4xf32>, vector<4x256xf32>, vector<4x256xf32> -> vector<4x256xf32>
    %108 = arith.addf %100, %107 : vector<4x256xf32>
    %109 = vector.extract_strided_slice %83 {offsets = [0, 16], sizes = [4, 256], strides = [1, 1]} : vector<4x290xf32> to vector<4x256xf32>
    %110 = vector.extract_strided_slice %0 {offsets = [3, 0], sizes = [1, 256], strides = [1, 1]} : vector<9x256xf32> to vector<1x256xf32>
    %111 = vector.broadcast %110 : vector<1x256xf32> to vector<4x256xf32>
    %112 = arith.mulf %109, %111 : vector<4x256xf32>
    %c3_51 = arith.constant 3 : index
    %c0_52 = arith.constant 0 : index
    %c0_53 = arith.constant 0 : index
    %113 = vector.load %arg4[%c3_51, %c0_52, %c0_53] : memref<9x4x4xf32, #tpu.memory_space<vmem>>, vector<1x4x4xf32>
    %114 = vector.shape_cast %113 : vector<1x4x4xf32> to vector<4x4xf32>
    %cst_54 = arith.constant dense<0.000000e+00> : vector<4x256xf32>
    %115 = tpu.matmul %114, %112, %cst_54 {dimension_numbers = #tpu.dot_dimension_numbers<[1], [0], [0], [1], [0, 0, 1, 1], [], []>} : vector<4x4xf32>, vector<4x256xf32>, vector<4x256xf32> -> vector<4x256xf32>
    %116 = arith.addf %108, %115 : vector<4x256xf32>
    %117 = vector.extract_strided_slice %83 {offsets = [0, 17], sizes = [4, 256], strides = [1, 1]} : vector<4x290xf32> to vector<4x256xf32>
    %c4_55 = arith.constant 4 : index
    %c0_56 = arith.constant 0 : index
    %c0_57 = arith.constant 0 : index
    %118 = vector.load %arg4[%c4_55, %c0_56, %c0_57] : memref<9x4x4xf32, #tpu.memory_space<vmem>>, vector<1x4x4xf32>
    %119 = vector.shape_cast %118 : vector<1x4x4xf32> to vector<4x4xf32>
    %cst_58 = arith.constant dense<0.000000e+00> : vector<4x256xf32>
    %120 = tpu.matmul %119, %117, %cst_58 {dimension_numbers = #tpu.dot_dimension_numbers<[1], [0], [0], [1], [0, 0, 1, 1], [], []>} : vector<4x4xf32>, vector<4x256xf32>, vector<4x256xf32> -> vector<4x256xf32>
    %121 = arith.addf %116, %120 : vector<4x256xf32>
    %122 = vector.extract_strided_slice %83 {offsets = [0, 18], sizes = [4, 256], strides = [1, 1]} : vector<4x290xf32> to vector<4x256xf32>
    %123 = vector.extract_strided_slice %0 {offsets = [5, 0], sizes = [1, 256], strides = [1, 1]} : vector<9x256xf32> to vector<1x256xf32>
    %124 = vector.broadcast %123 : vector<1x256xf32> to vector<4x256xf32>
    %125 = arith.mulf %122, %124 : vector<4x256xf32>
    %c5_59 = arith.constant 5 : index
    %c0_60 = arith.constant 0 : index
    %c0_61 = arith.constant 0 : index
    %126 = vector.load %arg4[%c5_59, %c0_60, %c0_61] : memref<9x4x4xf32, #tpu.memory_space<vmem>>, vector<1x4x4xf32>
    %127 = vector.shape_cast %126 : vector<1x4x4xf32> to vector<4x4xf32>
    %cst_62 = arith.constant dense<0.000000e+00> : vector<4x256xf32>
    %128 = tpu.matmul %127, %125, %cst_62 {dimension_numbers = #tpu.dot_dimension_numbers<[1], [0], [0], [1], [0, 0, 1, 1], [], []>} : vector<4x4xf32>, vector<4x256xf32>, vector<4x256xf32> -> vector<4x256xf32>
    %129 = arith.addf %121, %128 : vector<4x256xf32>
    %130 = vector.extract_strided_slice %83 {offsets = [0, 32], sizes = [4, 256], strides = [1, 1]} : vector<4x290xf32> to vector<4x256xf32>
    %131 = vector.extract_strided_slice %0 {offsets = [6, 0], sizes = [1, 256], strides = [1, 1]} : vector<9x256xf32> to vector<1x256xf32>
    %132 = vector.broadcast %131 : vector<1x256xf32> to vector<4x256xf32>
    %133 = arith.mulf %130, %132 : vector<4x256xf32>
    %c6_63 = arith.constant 6 : index
    %c0_64 = arith.constant 0 : index
    %c0_65 = arith.constant 0 : index
    %134 = vector.load %arg4[%c6_63, %c0_64, %c0_65] : memref<9x4x4xf32, #tpu.memory_space<vmem>>, vector<1x4x4xf32>
    %135 = vector.shape_cast %134 : vector<1x4x4xf32> to vector<4x4xf32>
    %cst_66 = arith.constant dense<0.000000e+00> : vector<4x256xf32>
    %136 = tpu.matmul %135, %133, %cst_66 {dimension_numbers = #tpu.dot_dimension_numbers<[1], [0], [0], [1], [0, 0, 1, 1], [], []>} : vector<4x4xf32>, vector<4x256xf32>, vector<4x256xf32> -> vector<4x256xf32>
    %137 = arith.addf %129, %136 : vector<4x256xf32>
    %138 = vector.extract_strided_slice %83 {offsets = [0, 33], sizes = [4, 256], strides = [1, 1]} : vector<4x290xf32> to vector<4x256xf32>
    %139 = vector.extract_strided_slice %0 {offsets = [7, 0], sizes = [1, 256], strides = [1, 1]} : vector<9x256xf32> to vector<1x256xf32>
    %140 = vector.broadcast %139 : vector<1x256xf32> to vector<4x256xf32>
    %141 = arith.mulf %138, %140 : vector<4x256xf32>
    %c7_67 = arith.constant 7 : index
    %c0_68 = arith.constant 0 : index
    %c0_69 = arith.constant 0 : index
    %142 = vector.load %arg4[%c7_67, %c0_68, %c0_69] : memref<9x4x4xf32, #tpu.memory_space<vmem>>, vector<1x4x4xf32>
    %143 = vector.shape_cast %142 : vector<1x4x4xf32> to vector<4x4xf32>
    %cst_70 = arith.constant dense<0.000000e+00> : vector<4x256xf32>
    %144 = tpu.matmul %143, %141, %cst_70 {dimension_numbers = #tpu.dot_dimension_numbers<[1], [0], [0], [1], [0, 0, 1, 1], [], []>} : vector<4x4xf32>, vector<4x256xf32>, vector<4x256xf32> -> vector<4x256xf32>
    %145 = arith.addf %137, %144 : vector<4x256xf32>
    %146 = vector.extract_strided_slice %83 {offsets = [0, 34], sizes = [4, 256], strides = [1, 1]} : vector<4x290xf32> to vector<4x256xf32>
    %147 = vector.extract_strided_slice %0 {offsets = [8, 0], sizes = [1, 256], strides = [1, 1]} : vector<9x256xf32> to vector<1x256xf32>
    %148 = vector.broadcast %147 : vector<1x256xf32> to vector<4x256xf32>
    %149 = arith.mulf %146, %148 : vector<4x256xf32>
    %c8_71 = arith.constant 8 : index
    %c0_72 = arith.constant 0 : index
    %c0_73 = arith.constant 0 : index
    %150 = vector.load %arg4[%c8_71, %c0_72, %c0_73] : memref<9x4x4xf32, #tpu.memory_space<vmem>>, vector<1x4x4xf32>
    %151 = vector.shape_cast %150 : vector<1x4x4xf32> to vector<4x4xf32>
    %cst_74 = arith.constant dense<0.000000e+00> : vector<4x256xf32>
    %152 = tpu.matmul %151, %149, %cst_74 {dimension_numbers = #tpu.dot_dimension_numbers<[1], [0], [0], [1], [0, 0, 1, 1], [], []>} : vector<4x4xf32>, vector<4x256xf32>, vector<4x256xf32> -> vector<4x256xf32>
    %153 = arith.addf %145, %152 : vector<4x256xf32>
    %c0_75 = arith.constant 0 : index
    %c0_76 = arith.constant 0 : index
    %154 = vector.load %arg7[%c0_75, %c0_76] : memref<4x1xf32, #tpu.memory_space<vmem>>, vector<4x1xf32>
    %155 = vector.broadcast %154 : vector<4x1xf32> to vector<4x256xf32>
    %156 = arith.mulf %153, %155 : vector<4x256xf32>
    %c0_77 = arith.constant 0 : index
    %c0_78 = arith.constant 0 : index
    %157 = vector.load %arg8[%c0_77, %c0_78] : memref<4x1xf32, #tpu.memory_space<vmem>>, vector<4x1xf32>
    %158 = vector.broadcast %157 : vector<4x1xf32> to vector<4x256xf32>
    %159 = arith.addf %156, %158 : vector<4x256xf32>
    %160 = arith.addf %159, %1 : vector<4x256xf32>
    %cst_79 = arith.constant 0.000000e+00 : f32
    %161 = vector.broadcast %cst_79 : f32 to vector<4x256xf32>
    %162 = arith.maximumf %160, %161 : vector<4x256xf32>
    %c0_80 = arith.constant 0 : index
    %c0_81 = arith.constant 0 : index
    %163 = vector.load %arg9[%c0_80, %c0_81] : memref<4x256xf32, #tpu.memory_space<vmem>>, vector<4x256xf32>
    tpu.vector_store %arg9[%c0_80, %c0_81], %162 {strides = array<i32>} : memref<4x256xf32, #tpu.memory_space<vmem>>, vector<4x256xf32>,
    return
  }
  func.func @transform_0(%arg0: i32) -> (i32, i32) {
    %c0_i32 = arith.constant 0 : i32
    %c0_i32_0 = arith.constant 0 : i32
    return %c0_i32, %arg0 : i32, i32
  }
  func.func @transform_1(%arg0: i32) -> (i32, i32) {
    %c0_i32 = arith.constant 0 : i32
    %c0_i32_0 = arith.constant 0 : i32
    %c0_i32_1 = arith.constant 0 : i32
    return %c0_i32, %c0_i32_0 : i32, i32
  }
  func.func @transform_2(%arg0: i32) -> (i32, i32, i32) {
    %c0_i32 = arith.constant 0 : i32
    %c0_i32_0 = arith.constant 0 : i32
    %c0_i32_1 = arith.constant 0 : i32
    %c0_i32_2 = arith.constant 0 : i32
    return %c0_i32, %c0_i32_0, %c0_i32_1 : i32, i32, i32
  }
  func.func @transform_3(%arg0: i32) -> (i32, i32, i32) {
    %c0_i32 = arith.constant 0 : i32
    %c0_i32_0 = arith.constant 0 : i32
    %c0_i32_1 = arith.constant 0 : i32
    %c0_i32_2 = arith.constant 0 : i32
    return %c0_i32, %c0_i32_0, %c0_i32_1 : i32, i32, i32
  }
  func.func @transform_4(%arg0: i32) -> (i32, i32) {
    %c0_i32 = arith.constant 0 : i32
    %c0_i32_0 = arith.constant 0 : i32
    %c0_i32_1 = arith.constant 0 : i32
    return %c0_i32, %c0_i32_0 : i32, i32
  }
  func.func @transform_5(%arg0: i32) -> (i32, i32) {
    %c0_i32 = arith.constant 0 : i32
    %c0_i32_0 = arith.constant 0 : i32
    %c0_i32_1 = arith.constant 0 : i32
    return %c0_i32, %c0_i32_0 : i32, i32
  }
  func.func @transform_6(%arg0: i32) -> (i32, i32) {
    %c0_i32 = arith.constant 0 : i32
    %c0_i32_0 = arith.constant 0 : i32
    %c0_i32_1 = arith.constant 0 : i32
    return %c0_i32, %c0_i32_0 : i32, i32
  }
  func.func @transform_7(%arg0: i32) -> (i32, i32) {
    %c0_i32 = arith.constant 0 : i32
    %c0_i32_0 = arith.constant 0 : i32
    %c0_i32_1 = arith.constant 0 : i32
    return %c0_i32, %c0_i32_0 : i32, i32
  }
  func.func @transform_8(%arg0: i32) -> (i32, i32) {
    %c0_i32 = arith.constant 0 : i32
    %c0_i32_0 = arith.constant 0 : i32
    return %c0_i32, %arg0 : i32, i32
  }
}

</mosaic_0001>

<llo_original>
// kernel: tpu_custom_call.1
$region0: #{tpu_custom_call.1}
  #allocation0 [shape = 'u32[]', space=smem, size = 0x4, offset = 0x4, fixed_abs, tag = 'smem constant byte address 0x4 - core index']
  #allocation1 [shape = 'u32[144,128]{1,0:T(1,128)}', space=vmem, size = 0x12000, scoped, tag = 'internal scratch']
  %s0 = inlined_call_operand.vmem [shape: f32[4,512], index: 0, kind: input, shape index: {}]
  %s1 = inlined_call_operand.vmem [shape: f32[9,256], index: 1, kind: input, shape index: {}]
  %s2 = inlined_call_operand.vmem [shape: f32[9,4,4], index: 2, kind: input, shape index: {}]
  %s3 = inlined_call_operand.vmem [shape: f32[9,4,4], index: 3, kind: input, shape index: {}]
  %s4 = inlined_call_operand.vmem [shape: f32[4,1], index: 4, kind: input, shape index: {}]
  %s5 = inlined_call_operand.vmem [shape: f32[4,1], index: 5, kind: input, shape index: {}]
  %s6 = inlined_call_operand.vmem [shape: f32[4,1], index: 6, kind: input, shape index: {}]
  %s7 = inlined_call_operand.vmem [shape: f32[4,1], index: 7, kind: input, shape index: {}]
  %s8 = inlined_call_operand.hbm [shape: f32[4,512], index: 8, kind: output, shape index: {}]
  %s9 = sld [smem:[#allocation0]]
  $region65: #{tpu_custom_call.1} parent=0
    _
  %s11 = ssub.s32 1, %s9
  %s12 = scalar_select 0, %s11, %s9
  $region1: #{tpu_custom_call.1} parent=0
    #allocation2 [shape = 'u8[8192]{0}', space=vmem, size = 0x2000, scoped, tag = 'output window, operand 0']
    #allocation3 [shape = 's32[2]{0}', space=sflag, size = 0x8, scoped, tag = 'scoped memory for tpu_custom_call.1']
    %13 = vsyncpa [#allocation3], 0
    %s14 = scalar_lea.sflag [#allocation3], 1
    %15 = vsyncpa %s14, 0
    loop: start=0, step=1, limit=4
    $region2: #{tpu_custom_call.1} parent=1 // loop_pre_header
      _
    $region3: #{tpu_custom_call.1} parent=1 // loop_header
      %s17 = sphi 0, %s21
      %p18 = scmp.ge.s32.totalorder %s17, 4
      %s27 = sphi 0, %s29
      %s30 = sphi 0, %s27
      %s31 = sphi 0, %s30
      %s47 = sphi 0, %s31
      %s51 = sphi 0, %s51
      %s53 = sphi 0, %s51
      %s54 = sphi 0, %s53
      %s68 = sphi 0, %s54
      %s72 = sphi 0, %s72
      %s74 = sphi 0, %s72
      %s75 = sphi 0, %s74
      %s89 = sphi 0, %s75
      %s93 = sphi 0, %s93
      %s95 = sphi 0, %s93
      %s96 = sphi 0, %s95
      %s110 = sphi 0, %s96
      %s114 = sphi 0, %s114
      %s116 = sphi 0, %s114
      %s117 = sphi 0, %s116
      %s131 = sphi 0, %s117
      %s135 = sphi 0, %s135
      %s137 = sphi 0, %s135
      %s138 = sphi 0, %s137
      %s152 = sphi 0, %s138
      %s156 = sphi 0, %s156
      %s158 = sphi 0, %s156
      %s159 = sphi 0, %s158
      %s173 = sphi 0, %s159
      %s177 = sphi 0, %s177
      %s179 = sphi 0, %s177
      %s180 = sphi 0, %s179
      %s194 = sphi 0, %s180
      %s200 = sphi 0, %s202
      %s203 = sphi 0, %s200
      %s204 = sphi 0, %s203
      %s220 = sphi 0, %s204
    $region4: #{tpu_custom_call.1} parent=1 // loop_header_branch
      %20 = sbr.rel (%p18) target = $region8
    $region5: #{tpu_custom_call.1} parent=1 // loop_body
      %s22 = ssub.s32 %s17, 1
      %s23 = ssub.s32 %s17, 2
      %s24 = sadd.s32 %s17, 1
      %s25 = ssub.s32 %s17, %s24
      %p26 = scmp.eq.s32.totalorder %s25, 0
      %s28 = sadd.s32 %s27, 1
      %s29 = scalar_select %p26, %s27, %s28
      %p32 = pneg %p26
      %p33 = scmp.eq.s32.totalorder %s17, 1
      %p34 = por %p32, %p33
      %p35 = scmp.ne.s32.totalorder %s27, %s30
      %p36 = scmp.eq.s32.totalorder %s17, 0
      %p37 = por %p35, %p36
      %p38 = scmp.ne.s32.totalorder %s27, %s30
      %p39 = scmp.eq.s32.totalorder %s22, 1
      %p40 = por %p38, %p39
      %p41 = scmp.ne.s32.totalorder %s30, %s31
      %p42 = scmp.eq.s32.totalorder %s22, 0
      %p43 = por %p41, %p42
      %p44 = scmp.ne.s32.totalorder %s30, %s31
      %p45 = scmp.eq.s32.totalorder %s23, 1
      %p46 = por %p44, %p45
      %p48 = scmp.ne.s32.totalorder %s31, %s47
      %p49 = scmp.eq.s32.totalorder %s23, 0
      %p50 = por %p48, %p49
      %s52 = sadd.s32 %s51, 1
      %p55 = scmp.eq.s32.totalorder %s17, 1
      %p56 = scmp.ne.s32.totalorder %s51, %s53
      %p57 = scmp.eq.s32.totalorder %s17, 0
      %p58 = por %p56, %p57
      %p59 = scmp.ne.s32.totalorder %s51, %s53
      %p60 = scmp.eq.s32.totalorder %s22, 1
      %p61 = por %p59, %p60
      %p62 = scmp.ne.s32.totalorder %s53, %s54
      %p63 = scmp.eq.s32.totalorder %s22, 0
      %p64 = por %p62, %p63
      %p65 = scmp.ne.s32.totalorder %s53, %s54
      %p66 = scmp.eq.s32.totalorder %s23, 1
      %p67 = por %p65, %p66
      %p69 = scmp.ne.s32.totalorder %s54, %s68
      %p70 = scmp.eq.s32.totalorder %s23, 0
      %p71 = por %p69, %p70
      %s73 = sadd.s32 %s72, 1
      %p76 = scmp.eq.s32.totalorder %s17, 1
      %p77 = scmp.ne.s32.totalorder %s72, %s74
      %p78 = scmp.eq.s32.totalorder %s17, 0
      %p79 = por %p77, %p78
      %p80 = scmp.ne.s32.totalorder %s72, %s74
      %p81 = scmp.eq.s32.totalorder %s22, 1
      %p82 = por %p80, %p81
      %p83 = scmp.ne.s32.totalorder %s74, %s75
      %p84 = scmp.eq.s32.totalorder %s22, 0
      %p85 = por %p83, %p84
      %p86 = scmp.ne.s32.totalorder %s74, %s75
      %p87 = scmp.eq.s32.totalorder %s23, 1
      %p88 = por %p86, %p87
      %p90 = scmp.ne.s32.totalorder %s75, %s89
      %p91 = scmp.eq.s32.totalorder %s23, 0
      %p92 = por %p90, %p91
      %s94 = sadd.s32 %s93, 1
      %p97 = scmp.eq.s32.totalorder %s17, 1
      %p98 = scmp.ne.s32.totalorder %s93, %s95
      %p99 = scmp.eq.s32.totalorder %s17, 0
      %p100 = por %p98, %p99
      %p101 = scmp.ne.s32.totalorder %s93, %s95
      %p102 = scmp.eq.s32.totalorder %s22, 1
      %p103 = por %p101, %p102
      %p104 = scmp.ne.s32.totalorder %s95, %s96
      %p105 = scmp.eq.s32.totalorder %s22, 0
      %p106 = por %p104, %p105
      %p107 = scmp.ne.s32.totalorder %s95, %s96
      %p108 = scmp.eq.s32.totalorder %s23, 1
      %p109 = por %p107, %p108
      %p111 = scmp.ne.s32.totalorder %s96, %s110
      %p112 = scmp.eq.s32.totalorder %s23, 0
      %p113 = por %p111, %p112
      %s115 = sadd.s32 %s114, 1
      %p118 = scmp.eq.s32.totalorder %s17, 1
      %p119 = scmp.ne.s32.totalorder %s114, %s116
      %p120 = scmp.eq.s32.totalorder %s17, 0
      %p121 = por %p119, %p120
      %p122 = scmp.ne.s32.totalorder %s114, %s116
      %p123 = scmp.eq.s32.totalorder %s22, 1
      %p124 = por %p122, %p123
      %p125 = scmp.ne.s32.totalorder %s116, %s117
      %p126 = scmp.eq.s32.totalorder %s22, 0
      %p127 = por %p125, %p126
      %p128 = scmp.ne.s32.totalorder %s116, %s117
      %p129 = scmp.eq.s32.totalorder %s23, 1
      %p130 = por %p128, %p129
      %p132 = scmp.ne.s32.totalorder %s117, %s131
      %p133 = scmp.eq.s32.totalorder %s23, 0
      %p134 = por %p132, %p133
      %s136 = sadd.s32 %s135, 1
      %p139 = scmp.eq.s32.totalorder %s17, 1
      %p140 = scmp.ne.s32.totalorder %s135, %s137
      %p141 = scmp.eq.s32.totalorder %s17, 0
      %p142 = por %p140, %p141
      %p143 = scmp.ne.s32.totalorder %s135, %s137
      %p144 = scmp.eq.s32.totalorder %s22, 1
      %p145 = por %p143, %p144
      %p146 = scmp.ne.s32.totalorder %s137, %s138
      %p147 = scmp.eq.s32.totalorder %s22, 0
      %p148 = por %p146, %p147
      %p149 = scmp.ne.s32.totalorder %s137, %s138
      %p150 = scmp.eq.s32.totalorder %s23, 1
      %p151 = por %p149, %p150
      %p153 = scmp.ne.s32.totalorder %s138, %s152
      %p154 = scmp.eq.s32.totalorder %s23, 0
      %p155 = por %p153, %p154
      %s157 = sadd.s32 %s156, 1
      %p160 = scmp.eq.s32.totalorder %s17, 1
      %p161 = scmp.ne.s32.totalorder %s156, %s158
      %p162 = scmp.eq.s32.totalorder %s17, 0
      %p163 = por %p161, %p162
      %p164 = scmp.ne.s32.totalorder %s156, %s158
      %p165 = scmp.eq.s32.totalorder %s22, 1
      %p166 = por %p164, %p165
      %p167 = scmp.ne.s32.totalorder %s158, %s159
      %p168 = scmp.eq.s32.totalorder %s22, 0
      %p169 = por %p167, %p168
      %p170 = scmp.ne.s32.totalorder %s158, %s159
      %p171 = scmp.eq.s32.totalorder %s23, 1
      %p172 = por %p170, %p171
      %p174 = scmp.ne.s32.totalorder %s159, %s173
      %p175 = scmp.eq.s32.totalorder %s23, 0
      %p176 = por %p174, %p175
      %s178 = sadd.s32 %s177, 1
      %p181 = scmp.eq.s32.totalorder %s17, 1
      %p182 = scmp.ne.s32.totalorder %s177, %s179
      %p183 = scmp.eq.s32.totalorder %s17, 0
      %p184 = por %p182, %p183
      %p185 = scmp.ne.s32.totalorder %s177, %s179
      %p186 = scmp.eq.s32.totalorder %s22, 1
      %p187 = por %p185, %p186
      %p188 = scmp.ne.s32.totalorder %s179, %s180
      %p189 = scmp.eq.s32.totalorder %s22, 0
      %p190 = por %p188, %p189
      %p191 = scmp.ne.s32.totalorder %s179, %s180
      %p192 = scmp.eq.s32.totalorder %s23, 1
      %p193 = por %p191, %p192
      %p195 = scmp.ne.s32.totalorder %s180, %s194
      %p196 = scmp.eq.s32.totalorder %s23, 0
      %p197 = por %p195, %p196
      %s198 = ssub.s32 %s17, %s24
      %p199 = scmp.eq.s32.totalorder %s198, 0
      %s201 = sadd.s32 %s200, 1
      %s202 = scalar_select %p199, %s200, %s201
      %p205 = pneg %p199
      %p206 = scmp.eq.s32.totalorder %s17, 1
      %p207 = por %p205, %p206
      %p208 = scmp.ne.s32.totalorder %s200, %s203
      %p209 = scmp.eq.s32.totalorder %s17, 0
      %p210 = por %p208, %p209
      %p211 = scmp.ne.s32.totalorder %s200, %s203
      %p212 = scmp.eq.s32.totalorder %s22, 1
      %p213 = por %p211, %p212
      %p214 = scmp.ne.s32.totalorder %s203, %s204
      %p215 = scmp.eq.s32.totalorder %s22, 0
      %p216 = por %p214, %p215
      %p217 = scmp.ne.s32.totalorder %s203, %s204
      %p218 = scmp.eq.s32.totalorder %s23, 1
      %p219 = por %p217, %p218
      %p221 = scmp.ne.s32.totalorder %s204, %s220
      %p222 = scmp.eq.s32.totalorder %s23, 0
      %p223 = por %p221, %p222
      %p224 = scmp.le.s32.totalorder 1, %s17
      %p225 = scmp.lt.s32.totalorder %s17, 3
      %p226 = pnand %p224, %p225
      %p227 = pneg %p226
      // Predicated region
      $region9: #{tpu_custom_call.1} parent=5 // pred_check
        _
      $region10: #{tpu_custom_call.1} parent=5 // pred_check_branch
        %229 = sbr.rel (%p226) target = $region12
      $region11: #{tpu_custom_call.1} parent=5 // pred_region
        %s230 = ssub.s32 %s17, 1
        // Predicated region
        $region13: #{tpu_custom_call.1} parent=11 // pred_check
          %p231 = pneg %p64
        $region14: #{tpu_custom_call.1} parent=11 // pred_check_branch
          %233 = sbr.rel (%p231) target = $region16
        $region15: #{tpu_custom_call.1} parent=11 // pred_region
          _
        $region16: #{tpu_custom_call.1} parent=11 // pred_fallthru
          _
        // Predicated region
        $region17: #{tpu_custom_call.1} parent=11 // pred_check
          %p234 = pneg %p85
        $region18: #{tpu_custom_call.1} parent=11 // pred_check_branch
          %236 = sbr.rel (%p234) target = $region20
        $region19: #{tpu_custom_call.1} parent=11 // pred_region
          _
        $region20: #{tpu_custom_call.1} parent=11 // pred_fallthru
          _
        // Predicated region
        $region21: #{tpu_custom_call.1} parent=11 // pred_check
          %p237 = pneg %p106
        $region22: #{tpu_custom_call.1} parent=11 // pred_check_branch
          %239 = sbr.rel (%p237) target = $region24
        $region23: #{tpu_custom_call.1} parent=11 // pred_region
          _
        $region24: #{tpu_custom_call.1} parent=11 // pred_fallthru
          _
        // Predicated region
        $region25: #{tpu_custom_call.1} parent=11 // pred_check
          %p240 = pneg %p127
        $region26: #{tpu_custom_call.1} parent=11 // pred_check_branch
          %242 = sbr.rel (%p240) target = $region28
        $region27: #{tpu_custom_call.1} parent=11 // pred_region
          _
        $region28: #{tpu_custom_call.1} parent=11 // pred_fallthru
          _
        // Predicated region
        $region29: #{tpu_custom_call.1} parent=11 // pred_check
          %p243 = pneg %p148
        $region30: #{tpu_custom_call.1} parent=11 // pred_check_branch
          %245 = sbr.rel (%p243) target = $region32
        $region31: #{tpu_custom_call.1} parent=11 // pred_region
          _
        $region32: #{tpu_custom_call.1} parent=11 // pred_fallthru
          _
        // Predicated region
        $region33: #{tpu_custom_call.1} parent=11 // pred_check
          %p246 = pneg %p169
        $region34: #{tpu_custom_call.1} parent=11 // pred_check_branch
          %248 = sbr.rel (%p246) target = $region36
        $region35: #{tpu_custom_call.1} parent=11 // pred_region
          _
        $region36: #{tpu_custom_call.1} parent=11 // pred_fallthru
          _
        // Predicated region
        $region37: #{tpu_custom_call.1} parent=11 // pred_check
          %p249 = pneg %p190
        $region38: #{tpu_custom_call.1} parent=11 // pred_check_branch
          %251 = sbr.rel (%p249) target = $region40
        $region39: #{tpu_custom_call.1} parent=11 // pred_region
          _
        $region40: #{tpu_custom_call.1} parent=11 // pred_fallthru
          _
      $region12: #{tpu_custom_call.1} parent=5 // pred_fallthru
        _
      %p252 = scmp.lt.s32.totalorder %s17, 2
      // Predicated region
      $region41: #{tpu_custom_call.1} parent=5 // pred_check
        %p253 = pneg %p252
      $region42: #{tpu_custom_call.1} parent=5 // pred_check_branch
        %255 = sbr.rel (%p253) target = $region44
      $region43: #{tpu_custom_call.1} parent=5 // pred_region
        // Predicated region
        $region45: #{tpu_custom_call.1} parent=43 // pred_check
          %p256 = pneg %p37
        $region46: #{tpu_custom_call.1} parent=43 // pred_check_branch
          %258 = sbr.rel (%p256) target = $region48
        $region47: #{tpu_custom_call.1} parent=43 // pred_region
          %s259 = smul.u32 2, %s17
          %p260 = scmp.lt.s32.totalorder %s259, 3
          %s261 = scalar_select %p260, %s259, 3
          %s262 = smul.addr %s261, 4
          %s263 = scalar_lea.vmem %s0, %s262
          %s264 = smul.u32 2, %s17
        $region48: #{tpu_custom_call.1} parent=43 // pred_fallthru
          _
      $region44: #{tpu_custom_call.1} parent=5 // pred_fallthru
        _
      %p265 = scmp.le.s32.totalorder 1, %s17
      %p266 = scmp.lt.s32.totalorder %s17, 3
      %p267 = pnand %p265, %p266
      %p268 = pneg %p267
      // Predicated region
      $region49: #{tpu_custom_call.1} parent=5 // pred_check
        _
      $region50: #{tpu_custom_call.1} parent=5 // pred_check_branch
        %270 = sbr.rel (%p267) target = $region52
      $region51: #{tpu_custom_call.1} parent=5 // pred_region
        %s271 = ssub.s32 %s17, 1
        %s272 = smul.u32 2, %s22
        %p273 = scmp.lt.s32.totalorder %s272, 3
        %s274 = scalar_select %p273, %s272, 3
        %s275 = smul.addr %s274, 4
        %s276 = scalar_lea.vmem %s0, %s275
        %p277 = pneg %p43
        %p278 = pneg %p40
        %p279 = pneg %p64
        %p280 = pneg %p61
        %p281 = pneg %p85
        %p282 = pneg %p82
        %p283 = pneg %p106
        %p284 = pneg %p103
        %p285 = pneg %p127
        %p286 = pneg %p124
        %p287 = pneg %p148
        %p288 = pneg %p145
        %p289 = pneg %p169
        %p290 = pneg %p166
        %p291 = pneg %p190
        %p292 = pneg %p187
        %p293 = pneg %p216
        %p294 = pneg %p213
        %s295 = sand.u32 %s203, 1
        %s296 = scalar_lea.sflag [#allocation3], %s295
        %s297 = sand.u32 %s203, 1
        %s298 = smul.addr %s297, 8
        %s299 = scalar_lea.vmem [#allocation2], %s298
        %s300 = smul.u32 2, %s22
        %p301 = scmp.lt.s32.totalorder %s300, 3
        %s302 = scalar_select %p301, %s300, 3
        %s303 = smul.addr %s302, 4
        %s304 = scalar_lea.vmem %s0, %s303
        %s305 = smul.u32 2, %s22
        %s306 = smul.u32 2, %s22
        %v307 = vld [vmem:[%s1] sm:$0xff]
        %v308 = vld [vmem:[%s1 + $0x8] sm:$0xff]
        %v309 = vld [vmem:[%s1 + $0x10] sm:$0x1]
        %v310 = vld [vmem:[%s1 + $0x18] sm:$0x1]
        %v311 = vld [vmem:[%s304] sm:$0xff]
        %v313 = vcombine.high %v311, %v311
        %314 = vrot.lane.b32.xlu0 %v311, 17
        %v315 = vpop.permute.xlu0 %314
        %316 = vrot.lane.b32.xlu0 %v313, 17
        %v317 = vpop.permute.xlu0 %316
        %vm318 = vcmask 138240
        %v319 = vsel %vm318, %v315, %v317
        %v323 = vsel %vm318, 0.0, %v315
        %v324 = vsel %vm318, %v317, 0.0
        %v325 = vlaneseq
        %v326 = vshrl.u32 %v325, 7
        %v327 = vsub.s32 0, %v326
        %v328 = vrot.slane %v307, %v327
        %v329 = vlaneseq
        %v330 = vshrl.u32 %v329, 7
        %v331 = vsub.s32 0, %v330
        %v332 = vrot.slane %v308, %v331
        %v333 = vmul.f32 %v323, %v328
        %v334 = vmul.f32 %v319, %v332
        %v335 = vld [vmem:[%s2] sm:$0xf]
        %v336 = vlaneseq
        %v337 = vshrl.u32 %v336, 7
        %v338 = vsub.s32 1, %v337
        %v339 = vrot.slane %v307, %v338
        %v340 = vlaneseq
        %v341 = vshrl.u32 %v340, 7
        %v342 = vsub.s32 1, %v341
        %v343 = vrot.slane %v308, %v342
        %346 = vrot.lane.b32.xlu0 %v339, 1
        %v347 = vpop.permute.xlu0 %346
        %348 = vrot.lane.b32.xlu0 %v343, 1
        %v349 = vpop.permute.xlu0 %348
        %vm350 = vcmask 7168
        %v351 = vsel %vm350, %v347, %v349
        %v355 = vmul.f32 %v323, %v347
        %v356 = vmul.f32 %v319, %v351
        %v357 = vmul.f32 %v324, %v349
        %s358 = scalar_lea.vmem %s2, 4
        %v359 = vld [vmem:[%s358] sm:$0xf]
        %363 = vrot.lane.b32.xlu0 %v355, 127
        %v364 = vpop.permute.xlu0 %363
        %365 = vrot.lane.b32.xlu0 %v356, 127
        %v366 = vpop.permute.xlu0 %365
        %367 = vrot.lane.b32.xlu0 %v357, 127
        %v368 = vpop.permute.xlu0 %367
        %vm369 = vcmask 1039360
        %v370 = vsel %vm369, %v364, %v366
        %v371 = vsel %vm369, %v366, %v368
        %vm372 = vcmask 31744
        %v374 = vsel %vm372, %v359, 0
        %vm376 = vcmask 1043456
        %v377 = vsel %vm376, %v370, 0
        %v379 = vsel %vm376, %v371, 0
        %381 = vmatprep.subr.mxu0 %v379
        %382 = vmatpush1.msra.mxu0 %v377
        %383 = vmatprep.subr.mxu0 0.0
        %384 = vmatpush1.msra.mxu0 0.0
        %385 = vmatprep.subr.mxu0 0.0
        %386 = vmatpush1.msra.mxu0 0.0
        %387 = vmatprep.subr.mxu0 0.0
        %388 = vmatpush1.msra.mxu0 0.0
        %389 = vmatprep.subr.mxu0 0.0
        %390 = vmatpush1.msra.mxu0 0.0
        %391 = vmatprep.subr.mxu0 0.0
        %392 = vmatpush1.msra.mxu0 0.0
        %393 = vmatprep.subr.mxu0 0.0
        %394 = vmatpush1.msra.mxu0 0.0
        %395 = vmatprep.subr.mxu0 0.0
        %396 = vmatpush1.msra.mxu0 0.0
        %397 = vmatprep.subr.mxu0 0.0
        %398 = vmatpush1.msra.mxu0 0.0
        %399 = vmatprep.subr.mxu0 0.0
        %400 = vmatpush1.msra.mxu0 0.0
        %401 = vmatprep.subr.mxu0 0.0
        %402 = vmatpush1.msra.mxu0 0.0
        %403 = vmatprep.subr.mxu0 0.0
        %404 = vmatpush1.msra.mxu0 0.0
        %405 = vmatprep.subr.mxu0 0.0
        %406 = vmatpush1.msra.mxu0 0.0
        %407 = vmatprep.subr.mxu0 0.0
        %408 = vmatpush1.msra.mxu0 0.0
        %409 = vmatprep.subr.mxu0 0.0
        %410 = vmatpush1.msra.mxu0 0.0
        %411 = vmatprep.subr.mxu0 0.0
        %412 = vmatpush1.msra.mxu0 0.0
        %413 = vmatprep.subr.mxu0 0.0
        %414 = vmatpush1.msra.mxu0 0.0
        %415 = vmatprep.subr.mxu0 0.0
        %416 = vmatpush1.msra.mxu0 0.0
        %417 = vmatprep.subr.mxu0 0.0
        %418 = vmatpush1.msra.mxu0 0.0
        %419 = vmatprep.subr.mxu0 0.0
        %420 = vmatpush1.msra.mxu0 0.0
        %421 = vmatprep.subr.mxu0 0.0
        %422 = vmatpush1.msra.mxu0 0.0
        %423 = vmatprep.subr.mxu0 0.0
        %424 = vmatpush1.msra.mxu0 0.0
        %425 = vmatprep.subr.mxu0 0.0
        %426 = vmatpush1.msra.mxu0 0.0
        %427 = vmatprep.subr.mxu0 0.0
        %428 = vmatpush1.msra.mxu0 0.0
        %429 = vmatprep.subr.mxu0 0.0
        %430 = vmatpush1.msra.mxu0 0.0
        %431 = vmatprep.subr.mxu0 0.0
        %432 = vmatpush1.msra.mxu0 0.0
        %433 = vmatprep.subr.mxu0 0.0
        %434 = vmatpush1.msra.mxu0 0.0
        %435 = vmatprep.subr.mxu0 0.0
        %436 = vmatpush1.msra.mxu0 0.0
        %437 = vmatprep.subr.mxu0 0.0
        %438 = vmatpush1.msra.mxu0 0.0
        %439 = vmatprep.subr.mxu0 0.0
        %440 = vmatpush1.msra.mxu0 0.0
        %441 = vmatprep.subr.mxu0 0.0
        %442 = vmatpush1.msra.mxu0 0.0
        %443 = vmatprep.subr.mxu0 0.0
        %444 = vmatpush1.msra.mxu0 0.0
        %445 = vmatprep.mubr.f32.mxu0 0.0
        %446 = vmatmul.mubr.f32.gmra.mrb[0].mxu0 %v374
        %v447 = vpop.f32.mrb[0].mxu0
        %v448 = vadd.f32 0.0, %v447
        %v449 = vpop.f32.mrb[0].mxu0
        %v450 = vadd.f32 0.0, %v449
        %451 = vdwg.mxu0
        %v453 = vsel %vm372, %v335, 0
        %v456 = vsel %vm376, %v333, 0
        %v459 = vsel %vm376, %v334, 0
        %461 = vmatprep.subr.mxu0 %v459
        %462 = vmatpush1.msra.mxu0 %v456
        %463 = vmatprep.subr.mxu0 0.0
        %464 = vmatpush1.msra.mxu0 0.0
        %465 = vmatprep.subr.mxu0 0.0
        %466 = vmatpush1.msra.mxu0 0.0
        %467 = vmatprep.subr.mxu0 0.0
        %468 = vmatpush1.msra.mxu0 0.0
        %469 = vmatprep.subr.mxu0 0.0
        %470 = vmatpush1.msra.mxu0 0.0
        %471 = vmatprep.subr.mxu0 0.0
        %472 = vmatpush1.msra.mxu0 0.0
        %473 = vmatprep.subr.mxu0 0.0
        %474 = vmatpush1.msra.mxu0 0.0
        %475 = vmatprep.subr.mxu0 0.0
        %476 = vmatpush1.msra.mxu0 0.0
        %477 = vmatprep.subr.mxu0 0.0
        %478 = vmatpush1.msra.mxu0 0.0
        %479 = vmatprep.subr.mxu0 0.0
        %480 = vmatpush1.msra.mxu0 0.0
        %481 = vmatprep.subr.mxu0 0.0
        %482 = vmatpush1.msra.mxu0 0.0
        %483 = vmatprep.subr.mxu0 0.0
        %484 = vmatpush1.msra.mxu0 0.0
        %485 = vmatprep.subr.mxu0 0.0
        %486 = vmatpush1.msra.mxu0 0.0
        %487 = vmatprep.subr.mxu0 0.0
        %488 = vmatpush1.msra.mxu0 0.0
        %489 = vmatprep.subr.mxu0 0.0
        %490 = vmatpush1.msra.mxu0 0.0
        %491 = vmatprep.subr.mxu0 0.0
        %492 = vmatpush1.msra.mxu0 0.0
        %493 = vmatprep.subr.mxu0 0.0
        %494 = vmatpush1.msra.mxu0 0.0
        %495 = vmatprep.subr.mxu0 0.0
        %496 = vmatpush1.msra.mxu0 0.0
        %497 = vmatprep.subr.mxu0 0.0
        %498 = vmatpush1.msra.mxu0 0.0
        %499 = vmatprep.subr.mxu0 0.0
        %500 = vmatpush1.msra.mxu0 0.0
        %501 = vmatprep.subr.mxu0 0.0
        %502 = vmatpush1.msra.mxu0 0.0
        %503 = vmatprep.subr.mxu0 0.0
        %504 = vmatpush1.msra.mxu0 0.0
        %505 = vmatprep.subr.mxu0 0.0
        %506 = vmatpush1.msra.mxu0 0.0
        %507 = vmatprep.subr.mxu0 0.0
        %508 = vmatpush1.msra.mxu0 0.0
        %509 = vmatprep.subr.mxu0 0.0
        %510 = vmatpush1.msra.mxu0 0.0
        %511 = vmatprep.subr.mxu0 0.0
        %512 = vmatpush1.msra.mxu0 0.0
        %513 = vmatprep.subr.mxu0 0.0
        %514 = vmatpush1.msra.mxu0 0.0
        %515 = vmatprep.subr.mxu0 0.0
        %516 = vmatpush1.msra.mxu0 0.0
        %517 = vmatprep.subr.mxu0 0.0
        %518 = vmatpush1.msra.mxu0 0.0
        %519 = vmatprep.subr.mxu0 0.0
        %520 = vmatpush1.msra.mxu0 0.0
        %521 = vmatprep.subr.mxu0 0.0
        %522 = vmatpush1.msra.mxu0 0.0
        %523 = vmatprep.subr.mxu0 0.0
        %524 = vmatpush1.msra.mxu0 0.0
        %525 = vmatprep.mubr.f32.mxu0 0.0
        %526 = vmatmul.mubr.f32.gmra.mrb[0].mxu0 %v453
        %v527 = vpop.f32.mrb[0].mxu0
        %v528 = vadd.f32 %v448, %v527
        %v529 = vpop.f32.mrb[0].mxu0
        %v530 = vadd.f32 %v450, %v529
        %531 = vdwg.mxu0
        %v532 = vlaneseq
        %v533 = vshrl.u32 %v532, 7
        %v534 = vsub.s32 2, %v533
        %v535 = vrot.slane %v307, %v534
        %v536 = vlaneseq
        %v537 = vshrl.u32 %v536, 7
        %v538 = vsub.s32 2, %v537
        %v539 = vrot.slane %v308, %v538
        %542 = vrot.lane.b32.xlu0 %v535, 2
        %v543 = vpop.permute.xlu0 %542
        %544 = vrot.lane.b32.xlu0 %v539, 2
        %v545 = vpop.permute.xlu0 %544
        %vm546 = vcmask 15360
        %v547 = vsel %vm546, %v543, %v545
        %v551 = vmul.f32 %v323, %v543
        %v552 = vmul.f32 %v319, %v547
        %v553 = vmul.f32 %v324, %v545
        %s554 = scalar_lea.vmem %s2, 8
        %v555 = vld [vmem:[%s554] sm:$0xf]
        %559 = vrot.lane.b32.xlu0 %v551, 126
        %v560 = vpop.permute.xlu0 %559
        %561 = vrot.lane.b32.xlu0 %v552, 126
        %v562 = vpop.permute.xlu0 %561
        %563 = vrot.lane.b32.xlu0 %v553, 126
        %v564 = vpop.permute.xlu0 %563
        %vm565 = vcmask 1031168
        %v566 = vsel %vm565, %v560, %v562
        %v567 = vsel %vm565, %v562, %v564
        %v569 = vsel %vm372, %v555, 0
        %v571 = vsel %vm376, %v566, 0
        %v573 = vsel %vm376, %v567, 0
        %575 = vmatprep.subr.mxu0 %v573
        %576 = vmatpush1.msra.mxu0 %v571
        %577 = vmatprep.subr.mxu0 0.0
        %578 = vmatpush1.msra.mxu0 0.0
        %579 = vmatprep.subr.mxu0 0.0
        %580 = vmatpush1.msra.mxu0 0.0
        %581 = vmatprep.subr.mxu0 0.0
        %582 = vmatpush1.msra.mxu0 0.0
        %583 = vmatprep.subr.mxu0 0.0
        %584 = vmatpush1.msra.mxu0 0.0
        %585 = vmatprep.subr.mxu0 0.0
        %586 = vmatpush1.msra.mxu0 0.0
        %587 = vmatprep.subr.mxu0 0.0
        %588 = vmatpush1.msra.mxu0 0.0
        %589 = vmatprep.subr.mxu0 0.0
        %590 = vmatpush1.msra.mxu0 0.0
        %591 = vmatprep.subr.mxu0 0.0
        %592 = vmatpush1.msra.mxu0 0.0
        %593 = vmatprep.subr.mxu0 0.0
        %594 = vmatpush1.msra.mxu0 0.0
        %595 = vmatprep.subr.mxu0 0.0
        %596 = vmatpush1.msra.mxu0 0.0
        %597 = vmatprep.subr.mxu0 0.0
        %598 = vmatpush1.msra.mxu0 0.0
        %599 = vmatprep.subr.mxu0 0.0
        %600 = vmatpush1.msra.mxu0 0.0
        %601 = vmatprep.subr.mxu0 0.0
        %602 = vmatpush1.msra.mxu0 0.0
        %603 = vmatprep.subr.mxu0 0.0
        %604 = vmatpush1.msra.mxu0 0.0
        %605 = vmatprep.subr.mxu0 0.0
        %606 = vmatpush1.msra.mxu0 0.0
        %607 = vmatprep.subr.mxu0 0.0
        %608 = vmatpush1.msra.mxu0 0.0
        %609 = vmatprep.subr.mxu0 0.0
        %610 = vmatpush1.msra.mxu0 0.0
        %611 = vmatprep.subr.mxu0 0.0
        %612 = vmatpush1.msra.mxu0 0.0
        %613 = vmatprep.subr.mxu0 0.0
        %614 = vmatpush1.msra.mxu0 0.0
        %615 = vmatprep.subr.mxu0 0.0
        %616 = vmatpush1.msra.mxu0 0.0
        %617 = vmatprep.subr.mxu0 0.0
        %618 = vmatpush1.msra.mxu0 0.0
        %619 = vmatprep.subr.mxu0 0.0
        %620 = vmatpush1.msra.mxu0 0.0
        %621 = vmatprep.subr.mxu0 0.0
        %622 = vmatpush1.msra.mxu0 0.0
        %623 = vmatprep.subr.mxu0 0.0
        %624 = vmatpush1.msra.mxu0 0.0
        %625 = vmatprep.subr.mxu0 0.0
        %626 = vmatpush1.msra.mxu0 0.0
        %627 = vmatprep.subr.mxu0 0.0
        %628 = vmatpush1.msra.mxu0 0.0
        %629 = vmatprep.subr.mxu0 0.0
        %630 = vmatpush1.msra.mxu0 0.0
        %631 = vmatprep.subr.mxu0 0.0
        %632 = vmatpush1.msra.mxu0 0.0
        %633 = vmatprep.subr.mxu0 0.0
        %634 = vmatpush1.msra.mxu0 0.0
        %635 = vmatprep.subr.mxu0 0.0
        %636 = vmatpush1.msra.mxu0 0.0
        %637 = vmatprep.subr.mxu0 0.0
        %638 = vmatpush1.msra.mxu0 0.0
        %639 = vmatprep.mubr.f32.mxu0 0.0
        %640 = vmatmul.mubr.f32.gmra.mrb[0].mxu0 %v569
        %v641 = vpop.f32.mrb[0].mxu0
        %v642 = vadd.f32 0.0, %v641
        %v643 = vpop.f32.mrb[0].mxu0
        %v644 = vadd.f32 0.0, %v643
        %645 = vdwg.mxu0
        %v646 = vadd.f32 %v528, %v642
        %v647 = vadd.f32 %v530, %v644
        %v648 = vlaneseq
        %v649 = vshrl.u32 %v648, 7
        %v650 = vsub.s32 3, %v649
        %v651 = vrot.slane %v307, %v650
        %v652 = vlaneseq
        %v653 = vshrl.u32 %v652, 7
        %v654 = vsub.s32 3, %v653
        %v655 = vrot.slane %v308, %v654
        %658 = vrot.lane.b32.xlu0 %v651, 16
        %v659 = vpop.permute.xlu0 %658
        %660 = vrot.lane.b32.xlu0 %v655, 16
        %v661 = vpop.permute.xlu0 %660
        %vm662 = vcmask 130048
        %v663 = vsel %vm662, %v659, %v661
        %v667 = vmul.f32 %v323, %v659
        %v668 = vmul.f32 %v319, %v663
        %v669 = vmul.f32 %v324, %v661
        %s670 = scalar_lea.vmem %s2, 12
        %v671 = vld [vmem:[%s670] sm:$0xf]
        %675 = vrot.lane.b32.xlu0 %v667, 112
        %v676 = vpop.permute.xlu0 %675
        %677 = vrot.lane.b32.xlu0 %v668, 112
        %v678 = vpop.permute.xlu0 %677
        %679 = vrot.lane.b32.xlu0 %v669, 112
        %v680 = vpop.permute.xlu0 %679
        %vm681 = vcmask 916480
        %v682 = vsel %vm681, %v676, %v678
        %v683 = vsel %vm681, %v678, %v680
        %v685 = vsel %vm372, %v671, 0
        %v687 = vsel %vm376, %v682, 0
        %v689 = vsel %vm376, %v683, 0
        %691 = vmatprep.subr.mxu0 %v689
        %692 = vmatpush1.msra.mxu0 %v687
        %693 = vmatprep.subr.mxu0 0.0
        %694 = vmatpush1.msra.mxu0 0.0
        %695 = vmatprep.subr.mxu0 0.0
        %696 = vmatpush1.msra.mxu0 0.0
        %697 = vmatprep.subr.mxu0 0.0
        %698 = vmatpush1.msra.mxu0 0.0
        %699 = vmatprep.subr.mxu0 0.0
        %700 = vmatpush1.msra.mxu0 0.0
        %701 = vmatprep.subr.mxu0 0.0
        %702 = vmatpush1.msra.mxu0 0.0
        %703 = vmatprep.subr.mxu0 0.0
        %704 = vmatpush1.msra.mxu0 0.0
        %705 = vmatprep.subr.mxu0 0.0
        %706 = vmatpush1.msra.mxu0 0.0
        %707 = vmatprep.subr.mxu0 0.0
        %708 = vmatpush1.msra.mxu0 0.0
        %709 = vmatprep.subr.mxu0 0.0
        %710 = vmatpush1.msra.mxu0 0.0
        %711 = vmatprep.subr.mxu0 0.0
        %712 = vmatpush1.msra.mxu0 0.0
        %713 = vmatprep.subr.mxu0 0.0
        %714 = vmatpush1.msra.mxu0 0.0
        %715 = vmatprep.subr.mxu0 0.0
        %716 = vmatpush1.msra.mxu0 0.0
        %717 = vmatprep.subr.mxu0 0.0
        %718 = vmatpush1.msra.mxu0 0.0
        %719 = vmatprep.subr.mxu0 0.0
        %720 = vmatpush1.msra.mxu0 0.0
        %721 = vmatprep.subr.mxu0 0.0
        %722 = vmatpush1.msra.mxu0 0.0
        %723 = vmatprep.subr.mxu0 0.0
        %724 = vmatpush1.msra.mxu0 0.0
        %725 = vmatprep.subr.mxu0 0.0
        %726 = vmatpush1.msra.mxu0 0.0
        %727 = vmatprep.subr.mxu0 0.0
        %728 = vmatpush1.msra.mxu0 0.0
        %729 = vmatprep.subr.mxu0 0.0
        %730 = vmatpush1.msra.mxu0 0.0
        %731 = vmatprep.subr.mxu0 0.0
        %732 = vmatpush1.msra.mxu0 0.0
        %733 = vmatprep.subr.mxu0 0.0
        %734 = vmatpush1.msra.mxu0 0.0
        %735 = vmatprep.subr.mxu0 0.0
        %736 = vmatpush1.msra.mxu0 0.0
        %737 = vmatprep.subr.mxu0 0.0
        %738 = vmatpush1.msra.mxu0 0.0
        %739 = vmatprep.subr.mxu0 0.0
        %740 = vmatpush1.msra.mxu0 0.0
        %741 = vmatprep.subr.mxu0 0.0
        %742 = vmatpush1.msra.mxu0 0.0
        %743 = vmatprep.subr.mxu0 0.0
        %744 = vmatpush1.msra.mxu0 0.0
        %745 = vmatprep.subr.mxu0 0.0
        %746 = vmatpush1.msra.mxu0 0.0
        %747 = vmatprep.subr.mxu0 0.0
        %748 = vmatpush1.msra.mxu0 0.0
        %749 = vmatprep.subr.mxu0 0.0
        %750 = vmatpush1.msra.mxu0 0.0
        %751 = vmatprep.subr.mxu0 0.0
        %752 = vmatpush1.msra.mxu0 0.0
        %753 = vmatprep.subr.mxu0 0.0
        %754 = vmatpush1.msra.mxu0 0.0
        %755 = vmatprep.mubr.f32.mxu0 0.0
        %756 = vmatmul.mubr.f32.gmra.mrb[0].mxu0 %v685
        %v757 = vpop.f32.mrb[0].mxu0
        %v758 = vadd.f32 0.0, %v757
        %v759 = vpop.f32.mrb[0].mxu0
        %v760 = vadd.f32 0.0, %v759
        %761 = vdwg.mxu0
        %v762 = vadd.f32 %v646, %v758
        %v763 = vadd.f32 %v647, %v760
        %s764 = scalar_lea.vmem %s2, 16
        %v765 = vld [vmem:[%s764] sm:$0xf]
        %768 = vrot.lane.b32.xlu0 %v323, 111
        %v769 = vpop.permute.xlu0 %768
        %770 = vrot.lane.b32.xlu0 %v319, 111
        %v771 = vpop.permute.xlu0 %770
        %772 = vrot.lane.b32.xlu0 %v324, 111
        %v773 = vpop.permute.xlu0 %772
        %vm774 = vcmask 908288
        %v775 = vsel %vm774, %v769, %v771
        %v776 = vsel %vm774, %v771, %v773
        %v778 = vsel %vm372, %v765, 0
        %v780 = vsel %vm376, %v775, 0
        %v782 = vsel %vm376, %v776, 0
        %784 = vmatprep.subr.mxu0 %v782
        %785 = vmatpush1.msra.mxu0 %v780
        %786 = vmatprep.subr.mxu0 0.0
        %787 = vmatpush1.msra.mxu0 0.0
        %788 = vmatprep.subr.mxu0 0.0
        %789 = vmatpush1.msra.mxu0 0.0
        %790 = vmatprep.subr.mxu0 0.0
        %791 = vmatpush1.msra.mxu0 0.0
        %792 = vmatprep.subr.mxu0 0.0
        %793 = vmatpush1.msra.mxu0 0.0
        %794 = vmatprep.subr.mxu0 0.0
        %795 = vmatpush1.msra.mxu0 0.0
        %796 = vmatprep.subr.mxu0 0.0
        %797 = vmatpush1.msra.mxu0 0.0
        %798 = vmatprep.subr.mxu0 0.0
        %799 = vmatpush1.msra.mxu0 0.0
        %800 = vmatprep.subr.mxu0 0.0
        %801 = vmatpush1.msra.mxu0 0.0
        %802 = vmatprep.subr.mxu0 0.0
        %803 = vmatpush1.msra.mxu0 0.0
        %804 = vmatprep.subr.mxu0 0.0
        %805 = vmatpush1.msra.mxu0 0.0
        %806 = vmatprep.subr.mxu0 0.0
        %807 = vmatpush1.msra.mxu0 0.0
        %808 = vmatprep.subr.mxu0 0.0
        %809 = vmatpush1.msra.mxu0 0.0
        %810 = vmatprep.subr.mxu0 0.0
        %811 = vmatpush1.msra.mxu0 0.0
        %812 = vmatprep.subr.mxu0 0.0
        %813 = vmatpush1.msra.mxu0 0.0
        %814 = vmatprep.subr.mxu0 0.0
        %815 = vmatpush1.msra.mxu0 0.0
        %816 = vmatprep.subr.mxu0 0.0
        %817 = vmatpush1.msra.mxu0 0.0
        %818 = vmatprep.subr.mxu0 0.0
        %819 = vmatpush1.msra.mxu0 0.0
        %820 = vmatprep.subr.mxu0 0.0
        %821 = vmatpush1.msra.mxu0 0.0
        %822 = vmatprep.subr.mxu0 0.0
        %823 = vmatpush1.msra.mxu0 0.0
        %824 = vmatprep.subr.mxu0 0.0
        %825 = vmatpush1.msra.mxu0 0.0
        %826 = vmatprep.subr.mxu0 0.0
        %827 = vmatpush1.msra.mxu0 0.0
        %828 = vmatprep.subr.mxu0 0.0
        %829 = vmatpush1.msra.mxu0 0.0
        %830 = vmatprep.subr.mxu0 0.0
        %831 = vmatpush1.msra.mxu0 0.0
        %832 = vmatprep.subr.mxu0 0.0
        %833 = vmatpush1.msra.mxu0 0.0
        %834 = vmatprep.subr.mxu0 0.0
        %835 = vmatpush1.msra.mxu0 0.0
        %836 = vmatprep.subr.mxu0 0.0
        %837 = vmatpush1.msra.mxu0 0.0
        %838 = vmatprep.subr.mxu0 0.0
        %839 = vmatpush1.msra.mxu0 0.0
        %840 = vmatprep.subr.mxu0 0.0
        %841 = vmatpush1.msra.mxu0 0.0
        %842 = vmatprep.subr.mxu0 0.0
        %843 = vmatpush1.msra.mxu0 0.0
        %844 = vmatprep.subr.mxu0 0.0
        %845 = vmatpush1.msra.mxu0 0.0
        %846 = vmatprep.subr.mxu0 0.0
        %847 = vmatpush1.msra.mxu0 0.0
        %848 = vmatprep.mubr.f32.mxu0 0.0
        %849 = vmatmul.mubr.f32.gmra.mrb[0].mxu0 %v778
        %v850 = vpop.f32.mrb[0].mxu0
        %v851 = vadd.f32 0.0, %v850
        %v852 = vpop.f32.mrb[0].mxu0
        %v853 = vadd.f32 0.0, %v852
        %854 = vdwg.mxu0
        %v855 = vadd.f32 %v762, %v851
        %v856 = vadd.f32 %v763, %v853
        %v857 = vlaneseq
        %v858 = vshrl.u32 %v857, 7
        %v859 = vsub.s32 5, %v858
        %v860 = vrot.slane %v307, %v859
        %v861 = vlaneseq
        %v862 = vshrl.u32 %v861, 7
        %v863 = vsub.s32 5, %v862
        %v864 = vrot.slane %v308, %v863
        %867 = vrot.lane.b32.xlu0 %v860, 18
        %v868 = vpop.permute.xlu0 %867
        %869 = vrot.lane.b32.xlu0 %v864, 18
        %v870 = vpop.permute.xlu0 %869
        %vm871 = vcmask 146432
        %v872 = vsel %vm871, %v868, %v870
        %v876 = vmul.f32 %v323, %v868
        %v877 = vmul.f32 %v319, %v872
        %v878 = vmul.f32 %v324, %v870
        %s879 = scalar_lea.vmem %s2, 20
        %v880 = vld [vmem:[%s879] sm:$0xf]
        %884 = vrot.lane.b32.xlu0 %v876, 110
        %v885 = vpop.permute.xlu0 %884
        %886 = vrot.lane.b32.xlu0 %v877, 110
        %v887 = vpop.permute.xlu0 %886
        %888 = vrot.lane.b32.xlu0 %v878, 110
        %v889 = vpop.permute.xlu0 %888
        %vm890 = vcmask 900096
        %v891 = vsel %vm890, %v885, %v887
        %v892 = vsel %vm890, %v887, %v889
        %v894 = vsel %vm372, %v880, 0
        %v896 = vsel %vm376, %v891, 0
        %v898 = vsel %vm376, %v892, 0
        %900 = vmatprep.subr.mxu0 %v898
        %901 = vmatpush1.msra.mxu0 %v896
        %902 = vmatprep.subr.mxu0 0.0
        %903 = vmatpush1.msra.mxu0 0.0
        %904 = vmatprep.subr.mxu0 0.0
        %905 = vmatpush1.msra.mxu0 0.0
        %906 = vmatprep.subr.mxu0 0.0
        %907 = vmatpush1.msra.mxu0 0.0
        %908 = vmatprep.subr.mxu0 0.0
        %909 = vmatpush1.msra.mxu0 0.0
        %910 = vmatprep.subr.mxu0 0.0
        %911 = vmatpush1.msra.mxu0 0.0
        %912 = vmatprep.subr.mxu0 0.0
        %913 = vmatpush1.msra.mxu0 0.0
        %914 = vmatprep.subr.mxu0 0.0
        %915 = vmatpush1.msra.mxu0 0.0
        %916 = vmatprep.subr.mxu0 0.0
        %917 = vmatpush1.msra.mxu0 0.0
        %918 = vmatprep.subr.mxu0 0.0
        %919 = vmatpush1.msra.mxu0 0.0
        %920 = vmatprep.subr.mxu0 0.0
        %921 = vmatpush1.msra.mxu0 0.0
        %922 = vmatprep.subr.mxu0 0.0
        %923 = vmatpush1.msra.mxu0 0.0
        %924 = vmatprep.subr.mxu0 0.0
        %925 = vmatpush1.msra.mxu0 0.0
        %926 = vmatprep.subr.mxu0 0.0
        %927 = vmatpush1.msra.mxu0 0.0
        %928 = vmatprep.subr.mxu0 0.0
        %929 = vmatpush1.msra.mxu0 0.0
        %930 = vmatprep.subr.mxu0 0.0
        %931 = vmatpush1.msra.mxu0 0.0
        %932 = vmatprep.subr.mxu0 0.0
        %933 = vmatpush1.msra.mxu0 0.0
        %934 = vmatprep.subr.mxu0 0.0
        %935 = vmatpush1.msra.mxu0 0.0
        %936 = vmatprep.subr.mxu0 0.0
        %937 = vmatpush1.msra.mxu0 0.0
        %938 = vmatprep.subr.mxu0 0.0
        %939 = vmatpush1.msra.mxu0 0.0
        %940 = vmatprep.subr.mxu0 0.0
        %941 = vmatpush1.msra.mxu0 0.0
        %942 = vmatprep.subr.mxu0 0.0
        %943 = vmatpush1.msra.mxu0 0.0
        %944 = vmatprep.subr.mxu0 0.0
        %945 = vmatpush1.msra.mxu0 0.0
        %946 = vmatprep.subr.mxu0 0.0
        %947 = vmatpush1.msra.mxu0 0.0
        %948 = vmatprep.subr.mxu0 0.0
        %949 = vmatpush1.msra.mxu0 0.0
        %950 = vmatprep.subr.mxu0 0.0
        %951 = vmatpush1.msra.mxu0 0.0
        %952 = vmatprep.subr.mxu0 0.0
        %953 = vmatpush1.msra.mxu0 0.0
        %954 = vmatprep.subr.mxu0 0.0
        %955 = vmatpush1.msra.mxu0 0.0
        %956 = vmatprep.subr.mxu0 0.0
        %957 = vmatpush1.msra.mxu0 0.0
        %958 = vmatprep.subr.mxu0 0.0
        %959 = vmatpush1.msra.mxu0 0.0
        %960 = vmatprep.subr.mxu0 0.0
        %961 = vmatpush1.msra.mxu0 0.0
        %962 = vmatprep.subr.mxu0 0.0
        %963 = vmatpush1.msra.mxu0 0.0
        %964 = vmatprep.mubr.f32.mxu0 0.0
        %965 = vmatmul.mubr.f32.gmra.mrb[0].mxu0 %v894
        %v966 = vpop.f32.mrb[0].mxu0
        %v967 = vadd.f32 0.0, %v966
        %v968 = vpop.f32.mrb[0].mxu0
        %v969 = vadd.f32 0.0, %v968
        %970 = vdwg.mxu0
        %v971 = vadd.f32 %v855, %v967
        %v972 = vadd.f32 %v856, %v969
        %v973 = vlaneseq
        %v974 = vshrl.u32 %v973, 7
        %v975 = vsub.s32 6, %v974
        %v976 = vrot.slane %v307, %v975
        %v977 = vlaneseq
        %v978 = vshrl.u32 %v977, 7
        %v979 = vsub.s32 6, %v978
        %v980 = vrot.slane %v308, %v979
        %983 = vrot.lane.b32.xlu0 %v976, 32
        %v984 = vpop.permute.xlu0 %983
        %985 = vrot.lane.b32.xlu0 %v980, 32
        %v986 = vpop.permute.xlu0 %985
        %vm987 = vcmask 261120
        %v988 = vsel %vm987, %v984, %v986
        %v992 = vmul.f32 %v323, %v984
        %v993 = vmul.f32 %v319, %v988
        %v994 = vmul.f32 %v324, %v986
        %s995 = scalar_lea.vmem %s2, 24
        %v996 = vld [vmem:[%s995] sm:$0xf]
        %1000 = vrot.lane.b32.xlu0 %v992, 96
        %v1001 = vpop.permute.xlu0 %1000
        %1002 = vrot.lane.b32.xlu0 %v993, 96
        %v1003 = vpop.permute.xlu0 %1002
        %1004 = vrot.lane.b32.xlu0 %v994, 96
        %v1005 = vpop.permute.xlu0 %1004
        %vm1006 = vcmask 785408
        %v1007 = vsel %vm1006, %v1001, %v1003
        %v1008 = vsel %vm1006, %v1003, %v1005
        %v1010 = vsel %vm372, %v996, 0
        %v1012 = vsel %vm376, %v1007, 0
        %v1014 = vsel %vm376, %v1008, 0
        %1016 = vmatprep.subr.mxu0 %v1014
        %1017 = vmatpush1.msra.mxu0 %v1012
        %1018 = vmatprep.subr.mxu0 0.0
        %1019 = vmatpush1.msra.mxu0 0.0
        %1020 = vmatprep.subr.mxu0 0.0
        %1021 = vmatpush1.msra.mxu0 0.0
        %1022 = vmatprep.subr.mxu0 0.0
        %1023 = vmatpush1.msra.mxu0 0.0
        %1024 = vmatprep.subr.mxu0 0.0
        %1025 = vmatpush1.msra.mxu0 0.0
        %1026 = vmatprep.subr.mxu0 0.0
        %1027 = vmatpush1.msra.mxu0 0.0
        %1028 = vmatprep.subr.mxu0 0.0
        %1029 = vmatpush1.msra.mxu0 0.0
        %1030 = vmatprep.subr.mxu0 0.0
        %1031 = vmatpush1.msra.mxu0 0.0
        %1032 = vmatprep.subr.mxu0 0.0
        %1033 = vmatpush1.msra.mxu0 0.0
        %1034 = vmatprep.subr.mxu0 0.0
        %1035 = vmatpush1.msra.mxu0 0.0
        %1036 = vmatprep.subr.mxu0 0.0
        %1037 = vmatpush1.msra.mxu0 0.0
        %1038 = vmatprep.subr.mxu0 0.0
        %1039 = vmatpush1.msra.mxu0 0.0
        %1040 = vmatprep.subr.mxu0 0.0
        %1041 = vmatpush1.msra.mxu0 0.0
        %1042 = vmatprep.subr.mxu0 0.0
        %1043 = vmatpush1.msra.mxu0 0.0
        %1044 = vmatprep.subr.mxu0 0.0
        %1045 = vmatpush1.msra.mxu0 0.0
        %1046 = vmatprep.subr.mxu0 0.0
        %1047 = vmatpush1.msra.mxu0 0.0
        %1048 = vmatprep.subr.mxu0 0.0
        %1049 = vmatpush1.msra.mxu0 0.0
        %1050 = vmatprep.subr.mxu0 0.0
        %1051 = vmatpush1.msra.mxu0 0.0
        %1052 = vmatprep.subr.mxu0 0.0
        %1053 = vmatpush1.msra.mxu0 0.0
        %1054 = vmatprep.subr.mxu0 0.0
        %1055 = vmatpush1.msra.mxu0 0.0
        %1056 = vmatprep.subr.mxu0 0.0
        %1057 = vmatpush1.msra.mxu0 0.0
        %1058 = vmatprep.subr.mxu0 0.0
        %1059 = vmatpush1.msra.mxu0 0.0
        %1060 = vmatprep.subr.mxu0 0.0
        %1061 = vmatpush1.msra.mxu0 0.0
        %1062 = vmatprep.subr.mxu0 0.0
        %1063 = vmatpush1.msra.mxu0 0.0
        %1064 = vmatprep.subr.mxu0 0.0
        %1065 = vmatpush1.msra.mxu0 0.0
        %1066 = vmatprep.subr.mxu0 0.0
        %1067 = vmatpush1.msra.mxu0 0.0
        %1068 = vmatprep.subr.mxu0 0.0
        %1069 = vmatpush1.msra.mxu0 0.0
        %1070 = vmatprep.subr.mxu0 0.0
        %1071 = vmatpush1.msra.mxu0 0.0
        %1072 = vmatprep.subr.mxu0 0.0
        %1073 = vmatpush1.msra.mxu0 0.0
        %1074 = vmatprep.subr.mxu0 0.0
        %1075 = vmatpush1.msra.mxu0 0.0
        %1076 = vmatprep.subr.mxu0 0.0
        %1077 = vmatpush1.msra.mxu0 0.0
        %1078 = vmatprep.subr.mxu0 0.0
        %1079 = vmatpush1.msra.mxu0 0.0
        %1080 = vmatprep.mubr.f32.mxu0 0.0
        %1081 = vmatmul.mubr.f32.gmra.mrb[0].mxu0 %v1010
        %v1082 = vpop.f32.mrb[0].mxu0
        %v1083 = vadd.f32 0.0, %v1082
        %v1084 = vpop.f32.mrb[0].mxu0
        %v1085 = vadd.f32 0.0, %v1084
        %1086 = vdwg.mxu0
        %v1087 = vadd.f32 %v971, %v1083
        %v1088 = vadd.f32 %v972, %v1085
        %v1089 = vlaneseq
        %v1090 = vshrl.u32 %v1089, 7
        %v1091 = vsub.s32 7, %v1090
        %v1092 = vrot.slane %v307, %v1091
        %v1093 = vlaneseq
        %v1094 = vshrl.u32 %v1093, 7
        %v1095 = vsub.s32 7, %v1094
        %v1096 = vrot.slane %v308, %v1095
        %1099 = vrot.lane.b32.xlu0 %v1092, 33
        %v1100 = vpop.permute.xlu0 %1099
        %1101 = vrot.lane.b32.xlu0 %v1096, 33
        %v1102 = vpop.permute.xlu0 %1101
        %vm1103 = vcmask 269312
        %v1104 = vsel %vm1103, %v1100, %v1102
        %v1108 = vmul.f32 %v323, %v1100
        %v1109 = vmul.f32 %v319, %v1104
        %v1110 = vmul.f32 %v324, %v1102
        %s1111 = scalar_lea.vmem %s2, 28
        %v1112 = vld [vmem:[%s1111] sm:$0xf]
        %1116 = vrot.lane.b32.xlu0 %v1108, 95
        %v1117 = vpop.permute.xlu0 %1116
        %1118 = vrot.lane.b32.xlu0 %v1109, 95
        %v1119 = vpop.permute.xlu0 %1118
        %1120 = vrot.lane.b32.xlu0 %v1110, 95
        %v1121 = vpop.permute.xlu0 %1120
        %vm1122 = vcmask 777216
        %v1123 = vsel %vm1122, %v1117, %v1119
        %v1124 = vsel %vm1122, %v1119, %v1121
        %v1126 = vsel %vm372, %v1112, 0
        %v1128 = vsel %vm376, %v1123, 0
        %v1130 = vsel %vm376, %v1124, 0
        %1132 = vmatprep.subr.mxu0 %v1130
        %1133 = vmatpush1.msra.mxu0 %v1128
        %1134 = vmatprep.subr.mxu0 0.0
        %1135 = vmatpush1.msra.mxu0 0.0
        %1136 = vmatprep.subr.mxu0 0.0
        %1137 = vmatpush1.msra.mxu0 0.0
        %1138 = vmatprep.subr.mxu0 0.0
        %1139 = vmatpush1.msra.mxu0 0.0
        %1140 = vmatprep.subr.mxu0 0.0
        %1141 = vmatpush1.msra.mxu0 0.0
        %1142 = vmatprep.subr.mxu0 0.0
        %1143 = vmatpush1.msra.mxu0 0.0
        %1144 = vmatprep.subr.mxu0 0.0
        %1145 = vmatpush1.msra.mxu0 0.0
        %1146 = vmatprep.subr.mxu0 0.0
        %1147 = vmatpush1.msra.mxu0 0.0
        %1148 = vmatprep.subr.mxu0 0.0
        %1149 = vmatpush1.msra.mxu0 0.0
        %1150 = vmatprep.subr.mxu0 0.0
        %1151 = vmatpush1.msra.mxu0 0.0
        %1152 = vmatprep.subr.mxu0 0.0
        %1153 = vmatpush1.msra.mxu0 0.0
        %1154 = vmatprep.subr.mxu0 0.0
        %1155 = vmatpush1.msra.mxu0 0.0
        %1156 = vmatprep.subr.mxu0 0.0
        %1157 = vmatpush1.msra.mxu0 0.0
        %1158 = vmatprep.subr.mxu0 0.0
        %1159 = vmatpush1.msra.mxu0 0.0
        %1160 = vmatprep.subr.mxu0 0.0
        %1161 = vmatpush1.msra.mxu0 0.0
        %1162 = vmatprep.subr.mxu0 0.0
        %1163 = vmatpush1.msra.mxu0 0.0
        %1164 = vmatprep.subr.mxu0 0.0
        %1165 = vmatpush1.msra.mxu0 0.0
        %1166 = vmatprep.subr.mxu0 0.0
        %1167 = vmatpush1.msra.mxu0 0.0
        %1168 = vmatprep.subr.mxu0 0.0
        %1169 = vmatpush1.msra.mxu0 0.0
        %1170 = vmatprep.subr.mxu0 0.0
        %1171 = vmatpush1.msra.mxu0 0.0
        %1172 = vmatprep.subr.mxu0 0.0
        %1173 = vmatpush1.msra.mxu0 0.0
        %1174 = vmatprep.subr.mxu0 0.0
        %1175 = vmatpush1.msra.mxu0 0.0
        %1176 = vmatprep.subr.mxu0 0.0
        %1177 = vmatpush1.msra.mxu0 0.0
        %1178 = vmatprep.subr.mxu0 0.0
        %1179 = vmatpush1.msra.mxu0 0.0
        %1180 = vmatprep.subr.mxu0 0.0
        %1181 = vmatpush1.msra.mxu0 0.0
        %1182 = vmatprep.subr.mxu0 0.0
        %1183 = vmatpush1.msra.mxu0 0.0
        %1184 = vmatprep.subr.mxu0 0.0
        %1185 = vmatpush1.msra.mxu0 0.0
        %1186 = vmatprep.subr.mxu0 0.0
        %1187 = vmatpush1.msra.mxu0 0.0
        %1188 = vmatprep.subr.mxu0 0.0
        %1189 = vmatpush1.msra.mxu0 0.0
        %1190 = vmatprep.subr.mxu0 0.0
        %1191 = vmatpush1.msra.mxu0 0.0
        %1192 = vmatprep.subr.mxu0 0.0
        %1193 = vmatpush1.msra.mxu0 0.0
        %1194 = vmatprep.subr.mxu0 0.0
        %1195 = vmatpush1.msra.mxu0 0.0
        %1196 = vmatprep.mubr.f32.mxu0 0.0
        %1197 = vmatmul.mubr.f32.gmra.mrb[0].mxu0 %v1126
        %v1198 = vpop.f32.mrb[0].mxu0
        %v1199 = vadd.f32 0.0, %v1198
        %v1200 = vpop.f32.mrb[0].mxu0
        %v1201 = vadd.f32 0.0, %v1200
        %1202 = vdwg.mxu0
        %v1203 = vadd.f32 %v1087, %v1199
        %v1204 = vadd.f32 %v1088, %v1201
        %v1205 = vlaneseq
        %v1206 = vshrl.u32 %v1205, 7
        %v1207 = vsub.s32 0, %v1206
        %v1208 = vrot.slane %v309, %v1207
        %v1209 = vlaneseq
        %v1210 = vshrl.u32 %v1209, 7
        %v1211 = vsub.s32 0, %v1210
        %v1212 = vrot.slane %v310, %v1211
        %1215 = vrot.lane.b32.xlu0 %v1208, 34
        %v1216 = vpop.permute.xlu0 %1215
        %1217 = vrot.lane.b32.xlu0 %v1212, 34
        %v1218 = vpop.permute.xlu0 %1217
        %vm1219 = vcmask 277504
        %v1220 = vsel %vm1219, %v1216, %v1218
        %v1224 = vmul.f32 %v323, %v1216
        %v1225 = vmul.f32 %v319, %v1220
        %v1226 = vmul.f32 %v324, %v1218
        %s1227 = scalar_lea.vmem %s2, 32
        %v1228 = vld [vmem:[%s1227] sm:$0xf]
        %1232 = vrot.lane.b32.xlu0 %v1224, 94
        %v1233 = vpop.permute.xlu0 %1232
        %1234 = vrot.lane.b32.xlu0 %v1225, 94
        %v1235 = vpop.permute.xlu0 %1234
        %1236 = vrot.lane.b32.xlu0 %v1226, 94
        %v1237 = vpop.permute.xlu0 %1236
        %vm1238 = vcmask 769024
        %v1239 = vsel %vm1238, %v1233, %v1235
        %v1240 = vsel %vm1238, %v1235, %v1237
        %v1242 = vsel %vm372, %v1228, 0
        %v1244 = vsel %vm376, %v1239, 0
        %v1246 = vsel %vm376, %v1240, 0
        %1248 = vmatprep.subr.mxu0 %v1246
        %1249 = vmatpush1.msra.mxu0 %v1244
        %1250 = vmatprep.subr.mxu0 0.0
        %1251 = vmatpush1.msra.mxu0 0.0
        %1252 = vmatprep.subr.mxu0 0.0
        %1253 = vmatpush1.msra.mxu0 0.0
        %1254 = vmatprep.subr.mxu0 0.0
        %1255 = vmatpush1.msra.mxu0 0.0
        %1256 = vmatprep.subr.mxu0 0.0
        %1257 = vmatpush1.msra.mxu0 0.0
        %1258 = vmatprep.subr.mxu0 0.0
        %1259 = vmatpush1.msra.mxu0 0.0
        %1260 = vmatprep.subr.mxu0 0.0
        %1261 = vmatpush1.msra.mxu0 0.0
        %1262 = vmatprep.subr.mxu0 0.0
        %1263 = vmatpush1.msra.mxu0 0.0
        %1264 = vmatprep.subr.mxu0 0.0
        %1265 = vmatpush1.msra.mxu0 0.0
        %1266 = vmatprep.subr.mxu0 0.0
        %1267 = vmatpush1.msra.mxu0 0.0
        %1268 = vmatprep.subr.mxu0 0.0
        %1269 = vmatpush1.msra.mxu0 0.0
        %1270 = vmatprep.subr.mxu0 0.0
        %1271 = vmatpush1.msra.mxu0 0.0
        %1272 = vmatprep.subr.mxu0 0.0
        %1273 = vmatpush1.msra.mxu0 0.0
        %1274 = vmatprep.subr.mxu0 0.0
        %1275 = vmatpush1.msra.mxu0 0.0
        %1276 = vmatprep.subr.mxu0 0.0
        %1277 = vmatpush1.msra.mxu0 0.0
        %1278 = vmatprep.subr.mxu0 0.0
        %1279 = vmatpush1.msra.mxu0 0.0
        %1280 = vmatprep.subr.mxu0 0.0
        %1281 = vmatpush1.msra.mxu0 0.0
        %1282 = vmatprep.subr.mxu0 0.0
        %1283 = vmatpush1.msra.mxu0 0.0
        %1284 = vmatprep.subr.mxu0 0.0
        %1285 = vmatpush1.msra.mxu0 0.0
        %1286 = vmatprep.subr.mxu0 0.0
        %1287 = vmatpush1.msra.mxu0 0.0
        %1288 = vmatprep.subr.mxu0 0.0
        %1289 = vmatpush1.msra.mxu0 0.0
        %1290 = vmatprep.subr.mxu0 0.0
        %1291 = vmatpush1.msra.mxu0 0.0
        %1292 = vmatprep.subr.mxu0 0.0
        %1293 = vmatpush1.msra.mxu0 0.0
        %1294 = vmatprep.subr.mxu0 0.0
        %1295 = vmatpush1.msra.mxu0 0.0
        %1296 = vmatprep.subr.mxu0 0.0
        %1297 = vmatpush1.msra.mxu0 0.0
        %1298 = vmatprep.subr.mxu0 0.0
        %1299 = vmatpush1.msra.mxu0 0.0
        %1300 = vmatprep.subr.mxu0 0.0
        %1301 = vmatpush1.msra.mxu0 0.0
        %1302 = vmatprep.subr.mxu0 0.0
        %1303 = vmatpush1.msra.mxu0 0.0
        %1304 = vmatprep.subr.mxu0 0.0
        %1305 = vmatpush1.msra.mxu0 0.0
        %1306 = vmatprep.subr.mxu0 0.0
        %1307 = vmatpush1.msra.mxu0 0.0
        %1308 = vmatprep.subr.mxu0 0.0
        %1309 = vmatpush1.msra.mxu0 0.0
        %1310 = vmatprep.subr.mxu0 0.0
        %1311 = vmatpush1.msra.mxu0 0.0
        %1312 = vmatprep.mubr.f32.mxu0 0.0
        %1313 = vmatmul.mubr.f32.gmra.mrb[0].mxu0 %v1242
        %v1314 = vpop.f32.mrb[0].mxu0
        %v1315 = vadd.f32 0.0, %v1314
        %v1316 = vpop.f32.mrb[0].mxu0
        %v1317 = vadd.f32 0.0, %v1316
        %1318 = vdwg.mxu0
        %v1319 = vadd.f32 %v1203, %v1315
        %v1320 = vadd.f32 %v1204, %v1317
        %v1321 = vld [vmem:[%s4] sm:$0xf]
        %1323 = vset.pattern.permute.xlu0 0
        %1324 = vperm.xlu0 %1323, %v1321
        %v1325 = vpop.permute.xlu0 %1324
        %v1327 = vmul.f32 %v1319, %v1325
        %v1328 = vmul.f32 %v1320, %v1325
        %v1329 = vld [vmem:[%s5] sm:$0xf]
        %1331 = vset.pattern.permute.xlu0 0
        %1332 = vperm.xlu0 %1331, %v1329
        %v1333 = vpop.permute.xlu0 %1332
        %v1335 = vadd.f32 %v1327, %v1333
        %v1336 = vadd.f32 %v1328, %v1333
        %v1337 = vmax.f32 %v1335, 0.0
        %v1338 = vmax.f32 %v1336, 0.0
        %1341 = vrot.lane.b32.xlu0 %v1337, 17
        %v1342 = vpop.permute.xlu0 %1341
        %1343 = vrot.lane.b32.xlu0 %v1338, 17
        %v1344 = vpop.permute.xlu0 %1343
        %v1345 = vsel %vm318, %v1342, %v1344
        %v1349 = vsel %vm318, 0.0, %v1342
        %v1350 = vsel %vm318, %v1344, 0.0
        %v1351 = vmul.f32 %v1349, %v328
        %v1352 = vmul.f32 %v1345, %v332
        %v1353 = vld [vmem:[%s3] sm:$0xf]
        %v1354 = vmul.f32 %v1349, %v347
        %v1355 = vmul.f32 %v1345, %v351
        %v1356 = vmul.f32 %v1350, %v349
        %s1357 = scalar_lea.vmem %s3, 4
        %v1358 = vld [vmem:[%s1357] sm:$0xf]
        %1362 = vrot.lane.b32.xlu0 %v1354, 127
        %v1363 = vpop.permute.xlu0 %1362
        %1364 = vrot.lane.b32.xlu0 %v1355, 127
        %v1365 = vpop.permute.xlu0 %1364
        %1366 = vrot.lane.b32.xlu0 %v1356, 127
        %v1367 = vpop.permute.xlu0 %1366
        %v1368 = vsel %vm369, %v1363, %v1365
        %v1369 = vsel %vm369, %v1365, %v1367
        %v1371 = vsel %vm372, %v1358, 0
        %v1373 = vsel %vm376, %v1368, 0
        %v1375 = vsel %vm376, %v1369, 0
        %1377 = vmatprep.subr.mxu0 %v1375
        %1378 = vmatpush1.msra.mxu0 %v1373
        %1379 = vmatprep.subr.mxu0 0.0
        %1380 = vmatpush1.msra.mxu0 0.0
        %1381 = vmatprep.subr.mxu0 0.0
        %1382 = vmatpush1.msra.mxu0 0.0
        %1383 = vmatprep.subr.mxu0 0.0
        %1384 = vmatpush1.msra.mxu0 0.0
        %1385 = vmatprep.subr.mxu0 0.0
        %1386 = vmatpush1.msra.mxu0 0.0
        %1387 = vmatprep.subr.mxu0 0.0
        %1388 = vmatpush1.msra.mxu0 0.0
        %1389 = vmatprep.subr.mxu0 0.0
        %1390 = vmatpush1.msra.mxu0 0.0
        %1391 = vmatprep.subr.mxu0 0.0
        %1392 = vmatpush1.msra.mxu0 0.0
        %1393 = vmatprep.subr.mxu0 0.0
        %1394 = vmatpush1.msra.mxu0 0.0
        %1395 = vmatprep.subr.mxu0 0.0
        %1396 = vmatpush1.msra.mxu0 0.0
        %1397 = vmatprep.subr.mxu0 0.0
        %1398 = vmatpush1.msra.mxu0 0.0
        %1399 = vmatprep.subr.mxu0 0.0
        %1400 = vmatpush1.msra.mxu0 0.0
        %1401 = vmatprep.subr.mxu0 0.0
        %1402 = vmatpush1.msra.mxu0 0.0
        %1403 = vmatprep.subr.mxu0 0.0
        %1404 = vmatpush1.msra.mxu0 0.0
        %1405 = vmatprep.subr.mxu0 0.0
        %1406 = vmatpush1.msra.mxu0 0.0
        %1407 = vmatprep.subr.mxu0 0.0
        %1408 = vmatpush1.msra.mxu0 0.0
        %1409 = vmatprep.subr.mxu0 0.0
        %1410 = vmatpush1.msra.mxu0 0.0
        %1411 = vmatprep.subr.mxu0 0.0
        %1412 = vmatpush1.msra.mxu0 0.0
        %1413 = vmatprep.subr.mxu0 0.0
        %1414 = vmatpush1.msra.mxu0 0.0
        %1415 = vmatprep.subr.mxu0 0.0
        %1416 = vmatpush1.msra.mxu0 0.0
        %1417 = vmatprep.subr.mxu0 0.0
        %1418 = vmatpush1.msra.mxu0 0.0
        %1419 = vmatprep.subr.mxu0 0.0
        %1420 = vmatpush1.msra.mxu0 0.0
        %1421 = vmatprep.subr.mxu0 0.0
        %1422 = vmatpush1.msra.mxu0 0.0
        %1423 = vmatprep.subr.mxu0 0.0
        %1424 = vmatpush1.msra.mxu0 0.0
        %1425 = vmatprep.subr.mxu0 0.0
        %1426 = vmatpush1.msra.mxu0 0.0
        %1427 = vmatprep.subr.mxu0 0.0
        %1428 = vmatpush1.msra.mxu0 0.0
        %1429 = vmatprep.subr.mxu0 0.0
        %1430 = vmatpush1.msra.mxu0 0.0
        %1431 = vmatprep.subr.mxu0 0.0
        %1432 = vmatpush1.msra.mxu0 0.0
        %1433 = vmatprep.subr.mxu0 0.0
        %1434 = vmatpush1.msra.mxu0 0.0
        %1435 = vmatprep.subr.mxu0 0.0
        %1436 = vmatpush1.msra.mxu0 0.0
        %1437 = vmatprep.subr.mxu0 0.0
        %1438 = vmatpush1.msra.mxu0 0.0
        %1439 = vmatprep.subr.mxu0 0.0
        %1440 = vmatpush1.msra.mxu0 0.0
        %1441 = vmatprep.mubr.f32.mxu0 0.0
        %1442 = vmatmul.mubr.f32.gmra.mrb[0].mxu0 %v1371
        %v1443 = vpop.f32.mrb[0].mxu0
        %v1444 = vadd.f32 0.0, %v1443
        %v1445 = vpop.f32.mrb[0].mxu0
        %v1446 = vadd.f32 0.0, %v1445
        %1447 = vdwg.mxu0
        %v1449 = vsel %vm372, %v1353, 0
        %v1452 = vsel %vm376, %v1351, 0
        %v1455 = vsel %vm376, %v1352, 0
        %1457 = vmatprep.subr.mxu0 %v1455
        %1458 = vmatpush1.msra.mxu0 %v1452
        %1459 = vmatprep.subr.mxu0 0.0
        %1460 = vmatpush1.msra.mxu0 0.0
        %1461 = vmatprep.subr.mxu0 0.0
        %1462 = vmatpush1.msra.mxu0 0.0
        %1463 = vmatprep.subr.mxu0 0.0
        %1464 = vmatpush1.msra.mxu0 0.0
        %1465 = vmatprep.subr.mxu0 0.0
        %1466 = vmatpush1.msra.mxu0 0.0
        %1467 = vmatprep.subr.mxu0 0.0
        %1468 = vmatpush1.msra.mxu0 0.0
        %1469 = vmatprep.subr.mxu0 0.0
        %1470 = vmatpush1.msra.mxu0 0.0
        %1471 = vmatprep.subr.mxu0 0.0
        %1472 = vmatpush1.msra.mxu0 0.0
        %1473 = vmatprep.subr.mxu0 0.0
        %1474 = vmatpush1.msra.mxu0 0.0
        %1475 = vmatprep.subr.mxu0 0.0
        %1476 = vmatpush1.msra.mxu0 0.0
        %1477 = vmatprep.subr.mxu0 0.0
        %1478 = vmatpush1.msra.mxu0 0.0
        %1479 = vmatprep.subr.mxu0 0.0
        %1480 = vmatpush1.msra.mxu0 0.0
        %1481 = vmatprep.subr.mxu0 0.0
        %1482 = vmatpush1.msra.mxu0 0.0
        %1483 = vmatprep.subr.mxu0 0.0
        %1484 = vmatpush1.msra.mxu0 0.0
        %1485 = vmatprep.subr.mxu0 0.0
        %1486 = vmatpush1.msra.mxu0 0.0
        %1487 = vmatprep.subr.mxu0 0.0
        %1488 = vmatpush1.msra.mxu0 0.0
        %1489 = vmatprep.subr.mxu0 0.0
        %1490 = vmatpush1.msra.mxu0 0.0
        %1491 = vmatprep.subr.mxu0 0.0
        %1492 = vmatpush1.msra.mxu0 0.0
        %1493 = vmatprep.subr.mxu0 0.0
        %1494 = vmatpush1.msra.mxu0 0.0
        %1495 = vmatprep.subr.mxu0 0.0
        %1496 = vmatpush1.msra.mxu0 0.0
        %1497 = vmatprep.subr.mxu0 0.0
        %1498 = vmatpush1.msra.mxu0 0.0
        %1499 = vmatprep.subr.mxu0 0.0
        %1500 = vmatpush1.msra.mxu0 0.0
        %1501 = vmatprep.subr.mxu0 0.0
        %1502 = vmatpush1.msra.mxu0 0.0
        %1503 = vmatprep.subr.mxu0 0.0
        %1504 = vmatpush1.msra.mxu0 0.0
        %1505 = vmatprep.subr.mxu0 0.0
        %1506 = vmatpush1.msra.mxu0 0.0
        %1507 = vmatprep.subr.mxu0 0.0
        %1508 = vmatpush1.msra.mxu0 0.0
        %1509 = vmatprep.subr.mxu0 0.0
        %1510 = vmatpush1.msra.mxu0 0.0
        %1511 = vmatprep.subr.mxu0 0.0
        %1512 = vmatpush1.msra.mxu0 0.0
        %1513 = vmatprep.subr.mxu0 0.0
        %1514 = vmatpush1.msra.mxu0 0.0
        %1515 = vmatprep.subr.mxu0 0.0
        %1516 = vmatpush1.msra.mxu0 0.0
        %1517 = vmatprep.subr.mxu0 0.0
        %1518 = vmatpush1.msra.mxu0 0.0
        %1519 = vmatprep.subr.mxu0 0.0
        %1520 = vmatpush1.msra.mxu0 0.0
        %1521 = vmatprep.mubr.f32.mxu0 0.0
        %1522 = vmatmul.mubr.f32.gmra.mrb[0].mxu0 %v1449
        %v1523 = vpop.f32.mrb[0].mxu0
        %v1524 = vadd.f32 %v1444, %v1523
        %v1525 = vpop.f32.mrb[0].mxu0
        %v1526 = vadd.f32 %v1446, %v1525
        %1527 = vdwg.mxu0
        %v1528 = vmul.f32 %v1349, %v543
        %v1529 = vmul.f32 %v1345, %v547
        %v1530 = vmul.f32 %v1350, %v545
        %s1531 = scalar_lea.vmem %s3, 8
        %v1532 = vld [vmem:[%s1531] sm:$0xf]
        %1536 = vrot.lane.b32.xlu0 %v1528, 126
        %v1537 = vpop.permute.xlu0 %1536
        %1538 = vrot.lane.b32.xlu0 %v1529, 126
        %v1539 = vpop.permute.xlu0 %1538
        %1540 = vrot.lane.b32.xlu0 %v1530, 126
        %v1541 = vpop.permute.xlu0 %1540
        %v1542 = vsel %vm565, %v1537, %v1539
        %v1543 = vsel %vm565, %v1539, %v1541
        %v1545 = vsel %vm372, %v1532, 0
        %v1547 = vsel %vm376, %v1542, 0
        %v1549 = vsel %vm376, %v1543, 0
        %1551 = vmatprep.subr.mxu0 %v1549
        %1552 = vmatpush1.msra.mxu0 %v1547
        %1553 = vmatprep.subr.mxu0 0.0
        %1554 = vmatpush1.msra.mxu0 0.0
        %1555 = vmatprep.subr.mxu0 0.0
        %1556 = vmatpush1.msra.mxu0 0.0
        %1557 = vmatprep.subr.mxu0 0.0
        %1558 = vmatpush1.msra.mxu0 0.0
        %1559 = vmatprep.subr.mxu0 0.0
        %1560 = vmatpush1.msra.mxu0 0.0
        %1561 = vmatprep.subr.mxu0 0.0
        %1562 = vmatpush1.msra.mxu0 0.0
        %1563 = vmatprep.subr.mxu0 0.0
        %1564 = vmatpush1.msra.mxu0 0.0
        %1565 = vmatprep.subr.mxu0 0.0
        %1566 = vmatpush1.msra.mxu0 0.0
        %1567 = vmatprep.subr.mxu0 0.0
        %1568 = vmatpush1.msra.mxu0 0.0
        %1569 = vmatprep.subr.mxu0 0.0
        %1570 = vmatpush1.msra.mxu0 0.0
        %1571 = vmatprep.subr.mxu0 0.0
        %1572 = vmatpush1.msra.mxu0 0.0
        %1573 = vmatprep.subr.mxu0 0.0
        %1574 = vmatpush1.msra.mxu0 0.0
        %1575 = vmatprep.subr.mxu0 0.0
        %1576 = vmatpush1.msra.mxu0 0.0
        %1577 = vmatprep.subr.mxu0 0.0
        %1578 = vmatpush1.msra.mxu0 0.0
        %1579 = vmatprep.subr.mxu0 0.0
        %1580 = vmatpush1.msra.mxu0 0.0
        %1581 = vmatprep.subr.mxu0 0.0
        %1582 = vmatpush1.msra.mxu0 0.0
        %1583 = vmatprep.subr.mxu0 0.0
        %1584 = vmatpush1.msra.mxu0 0.0
        %1585 = vmatprep.subr.mxu0 0.0
        %1586 = vmatpush1.msra.mxu0 0.0
        %1587 = vmatprep.subr.mxu0 0.0
        %1588 = vmatpush1.msra.mxu0 0.0
        %1589 = vmatprep.subr.mxu0 0.0
        %1590 = vmatpush1.msra.mxu0 0.0
        %1591 = vmatprep.subr.mxu0 0.0
        %1592 = vmatpush1.msra.mxu0 0.0
        %1593 = vmatprep.subr.mxu0 0.0
        %1594 = vmatpush1.msra.mxu0 0.0
        %1595 = vmatprep.subr.mxu0 0.0
        %1596 = vmatpush1.msra.mxu0 0.0
        %1597 = vmatprep.subr.mxu0 0.0
        %1598 = vmatpush1.msra.mxu0 0.0
        %1599 = vmatprep.subr.mxu0 0.0
        %1600 = vmatpush1.msra.mxu0 0.0
        %1601 = vmatprep.subr.mxu0 0.0
        %1602 = vmatpush1.msra.mxu0 0.0
        %1603 = vmatprep.subr.mxu0 0.0
        %1604 = vmatpush1.msra.mxu0 0.0
        %1605 = vmatprep.subr.mxu0 0.0
        %1606 = vmatpush1.msra.mxu0 0.0
        %1607 = vmatprep.subr.mxu0 0.0
        %1608 = vmatpush1.msra.mxu0 0.0
        %1609 = vmatprep.subr.mxu0 0.0
        %1610 = vmatpush1.msra.mxu0 0.0
        %1611 = vmatprep.subr.mxu0 0.0
        %1612 = vmatpush1.msra.mxu0 0.0
        %1613 = vmatprep.subr.mxu0 0.0
        %1614 = vmatpush1.msra.mxu0 0.0
        %1615 = vmatprep.mubr.f32.mxu0 0.0
        %1616 = vmatmul.mubr.f32.gmra.mrb[0].mxu0 %v1545
        %v1617 = vpop.f32.mrb[0].mxu0
        %v1618 = vadd.f32 0.0, %v1617
        %v1619 = vpop.f32.mrb[0].mxu0
        %v1620 = vadd.f32 0.0, %v1619
        %1621 = vdwg.mxu0
        %v1622 = vadd.f32 %v1524, %v1618
        %v1623 = vadd.f32 %v1526, %v1620
        %v1624 = vmul.f32 %v1349, %v659
        %v1625 = vmul.f32 %v1345, %v663
        %v1626 = vmul.f32 %v1350, %v661
        %s1627 = scalar_lea.vmem %s3, 12
        %v1628 = vld [vmem:[%s1627] sm:$0xf]
        %1632 = vrot.lane.b32.xlu0 %v1624, 112
        %v1633 = vpop.permute.xlu0 %1632
        %1634 = vrot.lane.b32.xlu0 %v1625, 112
        %v1635 = vpop.permute.xlu0 %1634
        %1636 = vrot.lane.b32.xlu0 %v1626, 112
        %v1637 = vpop.permute.xlu0 %1636
        %v1638 = vsel %vm681, %v1633, %v1635
        %v1639 = vsel %vm681, %v1635, %v1637
        %v1641 = vsel %vm372, %v1628, 0
        %v1643 = vsel %vm376, %v1638, 0
        %v1645 = vsel %vm376, %v1639, 0
        %1647 = vmatprep.subr.mxu0 %v1645
        %1648 = vmatpush1.msra.mxu0 %v1643
        %1649 = vmatprep.subr.mxu0 0.0
        %1650 = vmatpush1.msra.mxu0 0.0
        %1651 = vmatprep.subr.mxu0 0.0
        %1652 = vmatpush1.msra.mxu0 0.0
        %1653 = vmatprep.subr.mxu0 0.0
        %1654 = vmatpush1.msra.mxu0 0.0
        %1655 = vmatprep.subr.mxu0 0.0
        %1656 = vmatpush1.msra.mxu0 0.0
        %1657 = vmatprep.subr.mxu0 0.0
        %1658 = vmatpush1.msra.mxu0 0.0
        %1659 = vmatprep.subr.mxu0 0.0
        %1660 = vmatpush1.msra.mxu0 0.0
        %1661 = vmatprep.subr.mxu0 0.0
        %1662 = vmatpush1.msra.mxu0 0.0
        %1663 = vmatprep.subr.mxu0 0.0
        %1664 = vmatpush1.msra.mxu0 0.0
        %1665 = vmatprep.subr.mxu0 0.0
        %1666 = vmatpush1.msra.mxu0 0.0
        %1667 = vmatprep.subr.mxu0 0.0
        %1668 = vmatpush1.msra.mxu0 0.0
        %1669 = vmatprep.subr.mxu0 0.0
        %1670 = vmatpush1.msra.mxu0 0.0
        %1671 = vmatprep.subr.mxu0 0.0
        %1672 = vmatpush1.msra.mxu0 0.0
        %1673 = vmatprep.subr.mxu0 0.0
        %1674 = vmatpush1.msra.mxu0 0.0
        %1675 = vmatprep.subr.mxu0 0.0
        %1676 = vmatpush1.msra.mxu0 0.0
        %1677 = vmatprep.subr.mxu0 0.0
        %1678 = vmatpush1.msra.mxu0 0.0
        %1679 = vmatprep.subr.mxu0 0.0
        %1680 = vmatpush1.msra.mxu0 0.0
        %1681 = vmatprep.subr.mxu0 0.0
        %1682 = vmatpush1.msra.mxu0 0.0
        %1683 = vmatprep.subr.mxu0 0.0
        %1684 = vmatpush1.msra.mxu0 0.0
        %1685 = vmatprep.subr.mxu0 0.0
        %1686 = vmatpush1.msra.mxu0 0.0
        %1687 = vmatprep.subr.mxu0 0.0
        %1688 = vmatpush1.msra.mxu0 0.0
        %1689 = vmatprep.subr.mxu0 0.0
        %1690 = vmatpush1.msra.mxu0 0.0
        %1691 = vmatprep.subr.mxu0 0.0
        %1692 = vmatpush1.msra.mxu0 0.0
        %1693 = vmatprep.subr.mxu0 0.0
        %1694 = vmatpush1.msra.mxu0 0.0
        %1695 = vmatprep.subr.mxu0 0.0
        %1696 = vmatpush1.msra.mxu0 0.0
        %1697 = vmatprep.subr.mxu0 0.0
        %1698 = vmatpush1.msra.mxu0 0.0
        %1699 = vmatprep.subr.mxu0 0.0
        %1700 = vmatpush1.msra.mxu0 0.0
        %1701 = vmatprep.subr.mxu0 0.0
        %1702 = vmatpush1.msra.mxu0 0.0
        %1703 = vmatprep.subr.mxu0 0.0
        %1704 = vmatpush1.msra.mxu0 0.0
        %1705 = vmatprep.subr.mxu0 0.0
        %1706 = vmatpush1.msra.mxu0 0.0
        %1707 = vmatprep.subr.mxu0 0.0
        %1708 = vmatpush1.msra.mxu0 0.0
        %1709 = vmatprep.subr.mxu0 0.0
        %1710 = vmatpush1.msra.mxu0 0.0
        %1711 = vmatprep.mubr.f32.mxu0 0.0
        %1712 = vmatmul.mubr.f32.gmra.mrb[0].mxu0 %v1641
        %v1713 = vpop.f32.mrb[0].mxu0
        %v1714 = vadd.f32 0.0, %v1713
        %v1715 = vpop.f32.mrb[0].mxu0
        %v1716 = vadd.f32 0.0, %v1715
        %1717 = vdwg.mxu0
        %v1718 = vadd.f32 %v1622, %v1714
        %v1719 = vadd.f32 %v1623, %v1716
        %s1720 = scalar_lea.vmem %s3, 16
        %v1721 = vld [vmem:[%s1720] sm:$0xf]
        %1724 = vrot.lane.b32.xlu0 %v1349, 111
        %v1725 = vpop.permute.xlu0 %1724
        %1726 = vrot.lane.b32.xlu0 %v1345, 111
        %v1727 = vpop.permute.xlu0 %1726
        %1728 = vrot.lane.b32.xlu0 %v1350, 111
        %v1729 = vpop.permute.xlu0 %1728
        %v1730 = vsel %vm774, %v1725, %v1727
        %v1731 = vsel %vm774, %v1727, %v1729
        %v1733 = vsel %vm372, %v1721, 0
        %v1735 = vsel %vm376, %v1730, 0
        %v1737 = vsel %vm376, %v1731, 0
        %1739 = vmatprep.subr.mxu0 %v1737
        %1740 = vmatpush1.msra.mxu0 %v1735
        %1741 = vmatprep.subr.mxu0 0.0
        %1742 = vmatpush1.msra.mxu0 0.0
        %1743 = vmatprep.subr.mxu0 0.0
        %1744 = vmatpush1.msra.mxu0 0.0
        %1745 = vmatprep.subr.mxu0 0.0
        %1746 = vmatpush1.msra.mxu0 0.0
        %1747 = vmatprep.subr.mxu0 0.0
        %1748 = vmatpush1.msra.mxu0 0.0
        %1749 = vmatprep.subr.mxu0 0.0
        %1750 = vmatpush1.msra.mxu0 0.0
        %1751 = vmatprep.subr.mxu0 0.0
        %1752 = vmatpush1.msra.mxu0 0.0
        %1753 = vmatprep.subr.mxu0 0.0
        %1754 = vmatpush1.msra.mxu0 0.0
        %1755 = vmatprep.subr.mxu0 0.0
        %1756 = vmatpush1.msra.mxu0 0.0
        %1757 = vmatprep.subr.mxu0 0.0
        %1758 = vmatpush1.msra.mxu0 0.0
        %1759 = vmatprep.subr.mxu0 0.0
        %1760 = vmatpush1.msra.mxu0 0.0
        %1761 = vmatprep.subr.mxu0 0.0
        %1762 = vmatpush1.msra.mxu0 0.0
        %1763 = vmatprep.subr.mxu0 0.0
        %1764 = vmatpush1.msra.mxu0 0.0
        %1765 = vmatprep.subr.mxu0 0.0
        %1766 = vmatpush1.msra.mxu0 0.0
        %1767 = vmatprep.subr.mxu0 0.0
        %1768 = vmatpush1.msra.mxu0 0.0
        %1769 = vmatprep.subr.mxu0 0.0
        %1770 = vmatpush1.msra.mxu0 0.0
        %1771 = vmatprep.subr.mxu0 0.0
        %1772 = vmatpush1.msra.mxu0 0.0
        %1773 = vmatprep.subr.mxu0 0.0
        %1774 = vmatpush1.msra.mxu0 0.0
        %1775 = vmatprep.subr.mxu0 0.0
        %1776 = vmatpush1.msra.mxu0 0.0
        %1777 = vmatprep.subr.mxu0 0.0
        %1778 = vmatpush1.msra.mxu0 0.0
        %1779 = vmatprep.subr.mxu0 0.0
        %1780 = vmatpush1.msra.mxu0 0.0
        %1781 = vmatprep.subr.mxu0 0.0
        %1782 = vmatpush1.msra.mxu0 0.0
        %1783 = vmatprep.subr.mxu0 0.0
        %1784 = vmatpush1.msra.mxu0 0.0
        %1785 = vmatprep.subr.mxu0 0.0
        %1786 = vmatpush1.msra.mxu0 0.0
        %1787 = vmatprep.subr.mxu0 0.0
        %1788 = vmatpush1.msra.mxu0 0.0
        %1789 = vmatprep.subr.mxu0 0.0
        %1790 = vmatpush1.msra.mxu0 0.0
        %1791 = vmatprep.subr.mxu0 0.0
        %1792 = vmatpush1.msra.mxu0 0.0
        %1793 = vmatprep.subr.mxu0 0.0
        %1794 = vmatpush1.msra.mxu0 0.0
        %1795 = vmatprep.subr.mxu0 0.0
        %1796 = vmatpush1.msra.mxu0 0.0
        %1797 = vmatprep.subr.mxu0 0.0
        %1798 = vmatpush1.msra.mxu0 0.0
        %1799 = vmatprep.subr.mxu0 0.0
        %1800 = vmatpush1.msra.mxu0 0.0
        %1801 = vmatprep.subr.mxu0 0.0
        %1802 = vmatpush1.msra.mxu0 0.0
        %1803 = vmatprep.mubr.f32.mxu0 0.0
        %1804 = vmatmul.mubr.f32.gmra.mrb[0].mxu0 %v1733
        %v1805 = vpop.f32.mrb[0].mxu0
        %v1806 = vadd.f32 0.0, %v1805
        %v1807 = vpop.f32.mrb[0].mxu0
        %v1808 = vadd.f32 0.0, %v1807
        %1809 = vdwg.mxu0
        %v1810 = vadd.f32 %v1718, %v1806
        %v1811 = vadd.f32 %v1719, %v1808
        %v1812 = vmul.f32 %v1349, %v868
        %v1813 = vmul.f32 %v1345, %v872
        %v1814 = vmul.f32 %v1350, %v870
        %s1815 = scalar_lea.vmem %s3, 20
        %v1816 = vld [vmem:[%s1815] sm:$0xf]
        %1820 = vrot.lane.b32.xlu0 %v1812, 110
        %v1821 = vpop.permute.xlu0 %1820
        %1822 = vrot.lane.b32.xlu0 %v1813, 110
        %v1823 = vpop.permute.xlu0 %1822
        %1824 = vrot.lane.b32.xlu0 %v1814, 110
        %v1825 = vpop.permute.xlu0 %1824
        %v1826 = vsel %vm890, %v1821, %v1823
        %v1827 = vsel %vm890, %v1823, %v1825
        %v1829 = vsel %vm372, %v1816, 0
        %v1831 = vsel %vm376, %v1826, 0
        %v1833 = vsel %vm376, %v1827, 0
        %1835 = vmatprep.subr.mxu0 %v1833
        %1836 = vmatpush1.msra.mxu0 %v1831
        %1837 = vmatprep.subr.mxu0 0.0
        %1838 = vmatpush1.msra.mxu0 0.0
        %1839 = vmatprep.subr.mxu0 0.0
        %1840 = vmatpush1.msra.mxu0 0.0
        %1841 = vmatprep.subr.mxu0 0.0
        %1842 = vmatpush1.msra.mxu0 0.0
        %1843 = vmatprep.subr.mxu0 0.0
        %1844 = vmatpush1.msra.mxu0 0.0
        %1845 = vmatprep.subr.mxu0 0.0
        %1846 = vmatpush1.msra.mxu0 0.0
        %1847 = vmatprep.subr.mxu0 0.0
        %1848 = vmatpush1.msra.mxu0 0.0
        %1849 = vmatprep.subr.mxu0 0.0
        %1850 = vmatpush1.msra.mxu0 0.0
        %1851 = vmatprep.subr.mxu0 0.0
        %1852 = vmatpush1.msra.mxu0 0.0
        %1853 = vmatprep.subr.mxu0 0.0
        %1854 = vmatpush1.msra.mxu0 0.0
        %1855 = vmatprep.subr.mxu0 0.0
        %1856 = vmatpush1.msra.mxu0 0.0
        %1857 = vmatprep.subr.mxu0 0.0
        %1858 = vmatpush1.msra.mxu0 0.0
        %1859 = vmatprep.subr.mxu0 0.0
        %1860 = vmatpush1.msra.mxu0 0.0
        %1861 = vmatprep.subr.mxu0 0.0
        %1862 = vmatpush1.msra.mxu0 0.0
        %1863 = vmatprep.subr.mxu0 0.0
        %1864 = vmatpush1.msra.mxu0 0.0
        %1865 = vmatprep.subr.mxu0 0.0
        %1866 = vmatpush1.msra.mxu0 0.0
        %1867 = vmatprep.subr.mxu0 0.0
        %1868 = vmatpush1.msra.mxu0 0.0
        %1869 = vmatprep.subr.mxu0 0.0
        %1870 = vmatpush1.msra.mxu0 0.0
        %1871 = vmatprep.subr.mxu0 0.0
        %1872 = vmatpush1.msra.mxu0 0.0
        %1873 = vmatprep.subr.mxu0 0.0
        %1874 = vmatpush1.msra.mxu0 0.0
        %1875 = vmatprep.subr.mxu0 0.0
        %1876 = vmatpush1.msra.mxu0 0.0
        %1877 = vmatprep.subr.mxu0 0.0
        %1878 = vmatpush1.msra.mxu0 0.0
        %1879 = vmatprep.subr.mxu0 0.0
        %1880 = vmatpush1.msra.mxu0 0.0
        %1881 = vmatprep.subr.mxu0 0.0
        %1882 = vmatpush1.msra.mxu0 0.0
        %1883 = vmatprep.subr.mxu0 0.0
        %1884 = vmatpush1.msra.mxu0 0.0
        %1885 = vmatprep.subr.mxu0 0.0
        %1886 = vmatpush1.msra.mxu0 0.0
        %1887 = vmatprep.subr.mxu0 0.0
        %1888 = vmatpush1.msra.mxu0 0.0
        %1889 = vmatprep.subr.mxu0 0.0
        %1890 = vmatpush1.msra.mxu0 0.0
        %1891 = vmatprep.subr.mxu0 0.0
        %1892 = vmatpush1.msra.mxu0 0.0
        %1893 = vmatprep.subr.mxu0 0.0
        %1894 = vmatpush1.msra.mxu0 0.0
        %1895 = vmatprep.subr.mxu0 0.0
        %1896 = vmatpush1.msra.mxu0 0.0
        %1897 = vmatprep.subr.mxu0 0.0
        %1898 = vmatpush1.msra.mxu0 0.0
        %1899 = vmatprep.mubr.f32.mxu0 0.0
        %1900 = vmatmul.mubr.f32.gmra.mrb[0].mxu0 %v1829
        %v1901 = vpop.f32.mrb[0].mxu0
        %v1902 = vadd.f32 0.0, %v1901
        %v1903 = vpop.f32.mrb[0].mxu0
        %v1904 = vadd.f32 0.0, %v1903
        %1905 = vdwg.mxu0
        %v1906 = vadd.f32 %v1810, %v1902
        %v1907 = vadd.f32 %v1811, %v1904
        %v1908 = vmul.f32 %v1349, %v984
        %v1909 = vmul.f32 %v1345, %v988
        %v1910 = vmul.f32 %v1350, %v986
        %s1911 = scalar_lea.vmem %s3, 24
        %v1912 = vld [vmem:[%s1911] sm:$0xf]
        %1916 = vrot.lane.b32.xlu0 %v1908, 96
        %v1917 = vpop.permute.xlu0 %1916
        %1918 = vrot.lane.b32.xlu0 %v1909, 96
        %v1919 = vpop.permute.xlu0 %1918
        %1920 = vrot.lane.b32.xlu0 %v1910, 96
        %v1921 = vpop.permute.xlu0 %1920
        %v1922 = vsel %vm1006, %v1917, %v1919
        %v1923 = vsel %vm1006, %v1919, %v1921
        %v1925 = vsel %vm372, %v1912, 0
        %v1927 = vsel %vm376, %v1922, 0
        %v1929 = vsel %vm376, %v1923, 0
        %1931 = vmatprep.subr.mxu0 %v1929
        %1932 = vmatpush1.msra.mxu0 %v1927
        %1933 = vmatprep.subr.mxu0 0.0
        %1934 = vmatpush1.msra.mxu0 0.0
        %1935 = vmatprep.subr.mxu0 0.0
        %1936 = vmatpush1.msra.mxu0 0.0
        %1937 = vmatprep.subr.mxu0 0.0
        %1938 = vmatpush1.msra.mxu0 0.0
        %1939 = vmatprep.subr.mxu0 0.0
        %1940 = vmatpush1.msra.mxu0 0.0
        %1941 = vmatprep.subr.mxu0 0.0
        %1942 = vmatpush1.msra.mxu0 0.0
        %1943 = vmatprep.subr.mxu0 0.0
        %1944 = vmatpush1.msra.mxu0 0.0
        %1945 = vmatprep.subr.mxu0 0.0
        %1946 = vmatpush1.msra.mxu0 0.0
        %1947 = vmatprep.subr.mxu0 0.0
        %1948 = vmatpush1.msra.mxu0 0.0
        %1949 = vmatprep.subr.mxu0 0.0
        %1950 = vmatpush1.msra.mxu0 0.0
        %1951 = vmatprep.subr.mxu0 0.0
        %1952 = vmatpush1.msra.mxu0 0.0
        %1953 = vmatprep.subr.mxu0 0.0
        %1954 = vmatpush1.msra.mxu0 0.0
        %1955 = vmatprep.subr.mxu0 0.0
        %1956 = vmatpush1.msra.mxu0 0.0
        %1957 = vmatprep.subr.mxu0 0.0
        %1958 = vmatpush1.msra.mxu0 0.0
        %1959 = vmatprep.subr.mxu0 0.0
        %1960 = vmatpush1.msra.mxu0 0.0
        %1961 = vmatprep.subr.mxu0 0.0
        %1962 = vmatpush1.msra.mxu0 0.0
        %1963 = vmatprep.subr.mxu0 0.0
        %1964 = vmatpush1.msra.mxu0 0.0
        %1965 = vmatprep.subr.mxu0 0.0
        %1966 = vmatpush1.msra.mxu0 0.0
        %1967 = vmatprep.subr.mxu0 0.0
        %1968 = vmatpush1.msra.mxu0 0.0
        %1969 = vmatprep.subr.mxu0 0.0
        %1970 = vmatpush1.msra.mxu0 0.0
        %1971 = vmatprep.subr.mxu0 0.0
        %1972 = vmatpush1.msra.mxu0 0.0
        %1973 = vmatprep.subr.mxu0 0.0
        %1974 = vmatpush1.msra.mxu0 0.0
        %1975 = vmatprep.subr.mxu0 0.0
        %1976 = vmatpush1.msra.mxu0 0.0
        %1977 = vmatprep.subr.mxu0 0.0
        %1978 = vmatpush1.msra.mxu0 0.0
        %1979 = vmatprep.subr.mxu0 0.0
        %1980 = vmatpush1.msra.mxu0 0.0
        %1981 = vmatprep.subr.mxu0 0.0
        %1982 = vmatpush1.msra.mxu0 0.0
        %1983 = vmatprep.subr.mxu0 0.0
        %1984 = vmatpush1.msra.mxu0 0.0
        %1985 = vmatprep.subr.mxu0 0.0
        %1986 = vmatpush1.msra.mxu0 0.0
        %1987 = vmatprep.subr.mxu0 0.0
        %1988 = vmatpush1.msra.mxu0 0.0
        %1989 = vmatprep.subr.mxu0 0.0
        %1990 = vmatpush1.msra.mxu0 0.0
        %1991 = vmatprep.subr.mxu0 0.0
        %1992 = vmatpush1.msra.mxu0 0.0
        %1993 = vmatprep.subr.mxu0 0.0
        %1994 = vmatpush1.msra.mxu0 0.0
        %1995 = vmatprep.mubr.f32.mxu0 0.0
        %1996 = vmatmul.mubr.f32.gmra.mrb[0].mxu0 %v1925
        %v1997 = vpop.f32.mrb[0].mxu0
        %v1998 = vadd.f32 0.0, %v1997
        %v1999 = vpop.f32.mrb[0].mxu0
        %v2000 = vadd.f32 0.0, %v1999
        %2001 = vdwg.mxu0
        %v2002 = vadd.f32 %v1906, %v1998
        %v2003 = vadd.f32 %v1907, %v2000
        %v2004 = vmul.f32 %v1349, %v1100
        %v2005 = vmul.f32 %v1345, %v1104
        %v2006 = vmul.f32 %v1350, %v1102
        %s2007 = scalar_lea.vmem %s3, 28
        %v2008 = vld [vmem:[%s2007] sm:$0xf]
        %2012 = vrot.lane.b32.xlu0 %v2004, 95
        %v2013 = vpop.permute.xlu0 %2012
        %2014 = vrot.lane.b32.xlu0 %v2005, 95
        %v2015 = vpop.permute.xlu0 %2014
        %2016 = vrot.lane.b32.xlu0 %v2006, 95
        %v2017 = vpop.permute.xlu0 %2016
        %v2018 = vsel %vm1122, %v2013, %v2015
        %v2019 = vsel %vm1122, %v2015, %v2017
        %v2021 = vsel %vm372, %v2008, 0
        %v2023 = vsel %vm376, %v2018, 0
        %v2025 = vsel %vm376, %v2019, 0
        %2027 = vmatprep.subr.mxu0 %v2025
        %2028 = vmatpush1.msra.mxu0 %v2023
        %2029 = vmatprep.subr.mxu0 0.0
        %2030 = vmatpush1.msra.mxu0 0.0
        %2031 = vmatprep.subr.mxu0 0.0
        %2032 = vmatpush1.msra.mxu0 0.0
        %2033 = vmatprep.subr.mxu0 0.0
        %2034 = vmatpush1.msra.mxu0 0.0
        %2035 = vmatprep.subr.mxu0 0.0
        %2036 = vmatpush1.msra.mxu0 0.0
        %2037 = vmatprep.subr.mxu0 0.0
        %2038 = vmatpush1.msra.mxu0 0.0
        %2039 = vmatprep.subr.mxu0 0.0
        %2040 = vmatpush1.msra.mxu0 0.0
        %2041 = vmatprep.subr.mxu0 0.0
        %2042 = vmatpush1.msra.mxu0 0.0
        %2043 = vmatprep.subr.mxu0 0.0
        %2044 = vmatpush1.msra.mxu0 0.0
        %2045 = vmatprep.subr.mxu0 0.0
        %2046 = vmatpush1.msra.mxu0 0.0
        %2047 = vmatprep.subr.mxu0 0.0
        %2048 = vmatpush1.msra.mxu0 0.0
        %2049 = vmatprep.subr.mxu0 0.0
        %2050 = vmatpush1.msra.mxu0 0.0
        %2051 = vmatprep.subr.mxu0 0.0
        %2052 = vmatpush1.msra.mxu0 0.0
        %2053 = vmatprep.subr.mxu0 0.0
        %2054 = vmatpush1.msra.mxu0 0.0
        %2055 = vmatprep.subr.mxu0 0.0
        %2056 = vmatpush1.msra.mxu0 0.0
        %2057 = vmatprep.subr.mxu0 0.0
        %2058 = vmatpush1.msra.mxu0 0.0
        %2059 = vmatprep.subr.mxu0 0.0
        %2060 = vmatpush1.msra.mxu0 0.0
        %2061 = vmatprep.subr.mxu0 0.0
        %2062 = vmatpush1.msra.mxu0 0.0
        %2063 = vmatprep.subr.mxu0 0.0
        %2064 = vmatpush1.msra.mxu0 0.0
        %2065 = vmatprep.subr.mxu0 0.0
        %2066 = vmatpush1.msra.mxu0 0.0
        %2067 = vmatprep.subr.mxu0 0.0
        %2068 = vmatpush1.msra.mxu0 0.0
        %2069 = vmatprep.subr.mxu0 0.0
        %2070 = vmatpush1.msra.mxu0 0.0
        %2071 = vmatprep.subr.mxu0 0.0
        %2072 = vmatpush1.msra.mxu0 0.0
        %2073 = vmatprep.subr.mxu0 0.0
        %2074 = vmatpush1.msra.mxu0 0.0
        %2075 = vmatprep.subr.mxu0 0.0
        %2076 = vmatpush1.msra.mxu0 0.0
        %2077 = vmatprep.subr.mxu0 0.0
        %2078 = vmatpush1.msra.mxu0 0.0
        %2079 = vmatprep.subr.mxu0 0.0
        %2080 = vmatpush1.msra.mxu0 0.0
        %2081 = vmatprep.subr.mxu0 0.0
        %2082 = vmatpush1.msra.mxu0 0.0
        %2083 = vmatprep.subr.mxu0 0.0
        %2084 = vmatpush1.msra.mxu0 0.0
        %2085 = vmatprep.subr.mxu0 0.0
        %2086 = vmatpush1.msra.mxu0 0.0
        %2087 = vmatprep.subr.mxu0 0.0
        %2088 = vmatpush1.msra.mxu0 0.0
        %2089 = vmatprep.subr.mxu0 0.0
        %2090 = vmatpush1.msra.mxu0 0.0
        %2091 = vmatprep.mubr.f32.mxu0 0.0
        %2092 = vmatmul.mubr.f32.gmra.mrb[0].mxu0 %v2021
        %v2093 = vpop.f32.mrb[0].mxu0
        %v2094 = vadd.f32 0.0, %v2093
        %v2095 = vpop.f32.mrb[0].mxu0
        %v2096 = vadd.f32 0.0, %v2095
        %2097 = vdwg.mxu0
        %v2098 = vadd.f32 %v2002, %v2094
        %v2099 = vadd.f32 %v2003, %v2096
        %v2100 = vmul.f32 %v1349, %v1216
        %v2101 = vmul.f32 %v1345, %v1220
        %v2102 = vmul.f32 %v1350, %v1218
        %s2103 = scalar_lea.vmem %s3, 32
        %v2104 = vld [vmem:[%s2103] sm:$0xf]
        %2108 = vrot.lane.b32.xlu0 %v2100, 94
        %v2109 = vpop.permute.xlu0 %2108
        %2110 = vrot.lane.b32.xlu0 %v2101, 94
        %v2111 = vpop.permute.xlu0 %2110
        %2112 = vrot.lane.b32.xlu0 %v2102, 94
        %v2113 = vpop.permute.xlu0 %2112
        %v2114 = vsel %vm1238, %v2109, %v2111
        %v2115 = vsel %vm1238, %v2111, %v2113
        %v2117 = vsel %vm372, %v2104, 0
        %v2119 = vsel %vm376, %v2114, 0
        %v2121 = vsel %vm376, %v2115, 0
        %2123 = vmatprep.subr.mxu0 %v2121
        %2124 = vmatpush1.msra.mxu0 %v2119
        %2125 = vmatprep.subr.mxu0 0.0
        %2126 = vmatpush1.msra.mxu0 0.0
        %2127 = vmatprep.subr.mxu0 0.0
        %2128 = vmatpush1.msra.mxu0 0.0
        %2129 = vmatprep.subr.mxu0 0.0
        %2130 = vmatpush1.msra.mxu0 0.0
        %2131 = vmatprep.subr.mxu0 0.0
        %2132 = vmatpush1.msra.mxu0 0.0
        %2133 = vmatprep.subr.mxu0 0.0
        %2134 = vmatpush1.msra.mxu0 0.0
        %2135 = vmatprep.subr.mxu0 0.0
        %2136 = vmatpush1.msra.mxu0 0.0
        %2137 = vmatprep.subr.mxu0 0.0
        %2138 = vmatpush1.msra.mxu0 0.0
        %2139 = vmatprep.subr.mxu0 0.0
        %2140 = vmatpush1.msra.mxu0 0.0
        %2141 = vmatprep.subr.mxu0 0.0
        %2142 = vmatpush1.msra.mxu0 0.0
        %2143 = vmatprep.subr.mxu0 0.0
        %2144 = vmatpush1.msra.mxu0 0.0
        %2145 = vmatprep.subr.mxu0 0.0
        %2146 = vmatpush1.msra.mxu0 0.0
        %2147 = vmatprep.subr.mxu0 0.0
        %2148 = vmatpush1.msra.mxu0 0.0
        %2149 = vmatprep.subr.mxu0 0.0
        %2150 = vmatpush1.msra.mxu0 0.0
        %2151 = vmatprep.subr.mxu0 0.0
        %2152 = vmatpush1.msra.mxu0 0.0
        %2153 = vmatprep.subr.mxu0 0.0
        %2154 = vmatpush1.msra.mxu0 0.0
        %2155 = vmatprep.subr.mxu0 0.0
        %2156 = vmatpush1.msra.mxu0 0.0
        %2157 = vmatprep.subr.mxu0 0.0
        %2158 = vmatpush1.msra.mxu0 0.0
        %2159 = vmatprep.subr.mxu0 0.0
        %2160 = vmatpush1.msra.mxu0 0.0
        %2161 = vmatprep.subr.mxu0 0.0
        %2162 = vmatpush1.msra.mxu0 0.0
        %2163 = vmatprep.subr.mxu0 0.0
        %2164 = vmatpush1.msra.mxu0 0.0
        %2165 = vmatprep.subr.mxu0 0.0
        %2166 = vmatpush1.msra.mxu0 0.0
        %2167 = vmatprep.subr.mxu0 0.0
        %2168 = vmatpush1.msra.mxu0 0.0
        %2169 = vmatprep.subr.mxu0 0.0
        %2170 = vmatpush1.msra.mxu0 0.0
        %2171 = vmatprep.subr.mxu0 0.0
        %2172 = vmatpush1.msra.mxu0 0.0
        %2173 = vmatprep.subr.mxu0 0.0
        %2174 = vmatpush1.msra.mxu0 0.0
        %2175 = vmatprep.subr.mxu0 0.0
        %2176 = vmatpush1.msra.mxu0 0.0
        %2177 = vmatprep.subr.mxu0 0.0
        %2178 = vmatpush1.msra.mxu0 0.0
        %2179 = vmatprep.subr.mxu0 0.0
        %2180 = vmatpush1.msra.mxu0 0.0
        %2181 = vmatprep.subr.mxu0 0.0
        %2182 = vmatpush1.msra.mxu0 0.0
        %2183 = vmatprep.subr.mxu0 0.0
        %2184 = vmatpush1.msra.mxu0 0.0
        %2185 = vmatprep.subr.mxu0 0.0
        %2186 = vmatpush1.msra.mxu0 0.0
        %2187 = vmatprep.mubr.f32.mxu0 0.0
        %2188 = vmatmul.mubr.f32.gmra.mrb[0].mxu0 %v2117
        %v2189 = vpop.f32.mrb[0].mxu0
        %v2190 = vadd.f32 0.0, %v2189
        %v2191 = vpop.f32.mrb[0].mxu0
        %v2192 = vadd.f32 0.0, %v2191
        %2193 = vdwg.mxu0
        %v2194 = vadd.f32 %v2098, %v2190
        %v2195 = vadd.f32 %v2099, %v2192
        %v2196 = vld [vmem:[%s6] sm:$0xf]
        %2198 = vset.pattern.permute.xlu0 0
        %2199 = vperm.xlu0 %2198, %v2196
        %v2200 = vpop.permute.xlu0 %2199
        %v2202 = vmul.f32 %v2194, %v2200
        %v2203 = vmul.f32 %v2195, %v2200
        %v2204 = vld [vmem:[%s7] sm:$0xf]
        %2206 = vset.pattern.permute.xlu0 0
        %2207 = vperm.xlu0 %2206, %v2204
        %v2208 = vpop.permute.xlu0 %2207
        %v2210 = vadd.f32 %v2202, %v2208
        %v2211 = vadd.f32 %v2203, %v2208
        %v2213 = vadd.f32 %v2210, %v311
        %v2214 = vadd.f32 %v2211, %v313
        %v2215 = vmax.f32 %v2213, 0.0
        %v2216 = vmax.f32 %v2214, 0.0
        %v2219 = vcombine.low %v2215, %v2216
        %2221 = vst [vmem:[%s299] sm:$0xff] %v2219
        %s2222 = sand.u32 %s203, 1
        %s2223 = scalar_lea.sflag [#allocation3], %s2222
        %s2224 = sand.u32 %s203, 1
        %s2225 = smul.addr %s2224, 8
        %s2226 = scalar_lea.vmem [#allocation2], %s2225
        // Predicated region
        $region53: #{tpu_custom_call.1} parent=51 // pred_check
          %p2227 = pneg %p213
        $region54: #{tpu_custom_call.1} parent=51 // pred_check_branch
          %2229 = sbr.rel (%p2227) target = $region56
        $region55: #{tpu_custom_call.1} parent=51 // pred_region
          %s2230 = smul.u32 2, %s22
          %s2232 = ssub.s32 128, 128
          %2233 = vsyncadd %s2223, %s2232
          %s2234 = smul.addr %s2230, 64
          %s2235 = scalar_lea.hbm %s8, %s2234
          %s2237 = sshll.u32 %s2226, 4
          %s2238 = int_to_ptr.vmem [resolvable:$true] %s2237
          %2240 = dma.vmem_to_hbm [thread:$0]  %s2238, 128, %s2235, %s2223
        $region56: #{tpu_custom_call.1} parent=51 // pred_fallthru
          _
      $region52: #{tpu_custom_call.1} parent=5 // pred_fallthru
        _
      %p2241 = scmp.le.s32.totalorder 2, %s17
      // Predicated region
      $region57: #{tpu_custom_call.1} parent=5 // pred_check
        %p2242 = pneg %p2241
      $region58: #{tpu_custom_call.1} parent=5 // pred_check_branch
        %2244 = sbr.rel (%p2242) target = $region60
      $region59: #{tpu_custom_call.1} parent=5 // pred_region
        %s2245 = ssub.s32 %s17, 2
        // Predicated region
        $region61: #{tpu_custom_call.1} parent=59 // pred_check
          %p2246 = pneg %p219
        $region62: #{tpu_custom_call.1} parent=59 // pred_check_branch
          %2248 = sbr.rel (%p2246) target = $region64
        $region63: #{tpu_custom_call.1} parent=59 // pred_region
          %s2249 = sand.u32 %s204, 1
          %s2250 = scalar_lea.sflag [#allocation3], %s2249
          %s2251 = sand.u32 %s204, 1
          %s2252 = smul.addr %s2251, 8
          %s2253 = scalar_lea.vmem [#allocation2], %s2252
          %2254 = dma.done %s2250, 128
        $region64: #{tpu_custom_call.1} parent=59 // pred_fallthru
          _
      $region60: #{tpu_custom_call.1} parent=5 // pred_fallthru
        _
    $region6: #{tpu_custom_call.1} parent=1 // loop_footer
      %s21 = sadd.s32 1, %s17
    $region7: #{tpu_custom_call.1} parent=1 // loop_footer_branch
      %16 = sbr.rel target = $region3
    $region8: #{tpu_custom_call.1} parent=1 // loop_exit
      _
    %2255 = vsyncpa [#allocation3], 1
    %s2256 = scalar_lea.sflag [#allocation3], 1
    %2257 = vsyncpa %s2256, 1

</llo_original>
